<compile_context>
chip_gen: v7x
topology: tpu7x:2x2x1
jax: 0.10.0
libtpu: 0.0.40
codegen_flags: <defaults>
</compile_context>

<pallas_src>
import jax
import jax.numpy as jnp
from jax.experimental import pallas as pl
from jax.experimental.pallas import tpu as pltpu

# Layer widths of the PyTorch MLP: n_inputs -> 100 -> 90 -> ... -> 41
HIDDEN_DIMS = [100, 90, 90, 80, 80, 70, 70, 60, 60, 60, 60, 50, 50, 50, 50, 41]
N_LAYERS = len(HIDDEN_DIMS)          # 16
PAD = 128                            # lane-aligned feature padding
TB_MAX = 2048                        # max rows per batch tile
TB_ALIGN = 32                        # tile multiple of 32 -> half-tile multiple of 16 (bf16 sublanes)
SPLIT_THRESHOLD = 512                # split a 1-step grid into 2 steps above this many rows


def mlp_kernel(x_ref, w_ref, b_ref, o_ref):
    # x_ref: (TB, 128) bf16   w_ref: (16, 128, 128) bf16
    # b_ref: (16, 128) f32    o_ref: (TB, 128) f32
    #
    # Zero-padded weight rows/cols and zero biases keep padded lanes exactly
    # zero through every ReLU layer, so padded lanes never contaminate results.
    half = x_ref.shape[0] // 2
    h = [x_ref[:half, :], x_ref[half:, :]]          # two independent bf16 halves
    b_all = b_ref[...]                               # (16, 128) f32, loaded once
    for i in range(N_LAYERS):
        w_i = w_ref[i]                               # (128, 128) bf16, shared by both halves
        b_i = b_all[i][None, :]                      # (1, 128) f32
        last = i == N_LAYERS - 1
        nxt = []
        for j in range(2):                           # interleave: MXU(half j) overlaps VPU(half 1-j)
            acc = jnp.dot(h[j], w_i, preferred_element_type=jnp.float32) + b_i
            nxt.append(acc if last else jnp.maximum(acc, 0.0).astype(jnp.bfloat16))
        h = nxt
    o_ref[:half, :] = h[0]
    o_ref[half:, :] = h[1]


def init_params(n_inputs, key):
    """Matches MLP.init_weights(): weight ~ N(0, 0.01), bias = 0."""
    dims = [n_inputs] + HIDDEN_DIMS
    weights, biases = [], []
    for i in range(N_LAYERS):
        key, sub = jax.random.split(key)
        # stored as (in, out); same distribution as torch's (out, in).T
        w = 0.01 * jax.random.normal(sub, (dims[i], dims[i + 1]), dtype=jnp.float32)
        b = jnp.zeros((dims[i + 1],), dtype=jnp.float32)
        weights.append(w)
        biases.append(b)
    return weights, biases


def prepare_params(weights, biases):
    """One-time padding/stacking of parameters (hoisted out of the forward path).

    Returns:
      w_stack: (16, 128, 128) bfloat16  — zero-padded, (in, out) layout
      b_stack: (16, 128)      float32   — zero-padded, 2D (no sublane blow-up)
    """
    w_stack = jnp.stack([
        jnp.pad(w, ((0, PAD - w.shape[0]), (0, PAD - w.shape[1])))
        for w in weights
    ]).astype(jnp.bfloat16)
    b_stack = jnp.stack([jnp.pad(b, (0, PAD - b.shape[0])) for b in biases])
    return w_stack, b_stack


def _round_up(x, m):
    return ((x + m - 1) // m) * m


def _tile_and_pad(B):
    """Adaptive batch tile: minimal padding, even grid steps for v7x megacore."""
    b = max(TB_ALIGN, _round_up(B, TB_ALIGN))
    n_tiles = pl.cdiv(b, TB_MAX)
    if n_tiles == 1:
        if b >= SPLIT_THRESHOLD:       # enough rows to feed both v7x TensorCores
            n_tiles = 2
    elif n_tiles % 2 == 1:
        n_tiles += 1                   # even step count -> balanced 2-TC split
    tb = _round_up(pl.cdiv(b, n_tiles), TB_ALIGN)
    bp = tb * n_tiles
    return tb, bp


def mlp_forward(x, w_stack, b_stack):
    B, n_in = x.shape
    tb, bp = _tile_and_pad(B)

    # Per-call work: bf16 cast + zero-pad of activations only (params already prepared).
    xp = jnp.pad(x.astype(jnp.bfloat16), ((0, bp - B), (0, PAD - n_in)))

    grid = (bp // tb,)
    flops = 2 * bp * PAD * PAD * N_LAYERS
    bytes_accessed = (bp * PAD * 2            # bf16 activations in
                      + w_stack.size * 2      # bf16 weights
                      + b_stack.size * 4      # f32 biases
                      + bp * PAD * 4)         # f32 output

    out_padded = pl.pallas_call(
        mlp_kernel,
        out_shape=jax.ShapeDtypeStruct((bp, PAD), jnp.float32),
        grid=grid,
        in_specs=[
            # activation tile: pipelined / double-buffered over the batch grid
            pl.BlockSpec((tb, PAD), lambda i: (i, 0)),
            # weights + biases: constant index_map -> DMA'd once, VMEM-resident
            pl.BlockSpec((N_LAYERS, PAD, PAD), lambda i: (0, 0, 0)),
            pl.BlockSpec((N_LAYERS, PAD), lambda i: (0, 0)),
        ],
        out_specs=pl.BlockSpec((tb, PAD), lambda i: (i, 0)),
        compiler_params=pltpu.CompilerParams(
            dimension_semantics=("parallel",),   # v7x: shard batch over both TCs
        ),
        cost_estimate=pl.CostEstimate(
            flops=flops, transcendentals=0, bytes_accessed=bytes_accessed),
    )(xp, w_stack, b_stack)

    return out_padded[:B, : HIDDEN_DIMS[-1]]  # (B, 41)


def mlp_reference(x, weights, biases):
    """Pure-JAX reference with the same bf16-operand / f32-accumulate math."""
    h = x.astype(jnp.bfloat16)
    for i in range(N_LAYERS):
        acc = jnp.dot(
            h, weights[i].astype(jnp.bfloat16),
            preferred_element_type=jnp.float32,
        ) + biases[i]
        h = acc if i == N_LAYERS - 1 else jnp.maximum(acc, 0.0).astype(jnp.bfloat16)
    return h


if __name__ == "__main__":
    key = jax.random.PRNGKey(0)
    n_inputs = 32

    k_x, k_x2, k_p = jax.random.split(key, 3)
    weights, biases = init_params(n_inputs, k_p)
    w_stack, b_stack = prepare_params(weights, biases)   # one-time prep

    # Small-batch check (single grid step, tb=32, half-tiles of 16 rows).
    batch = 4
    x = jax.random.normal(k_x, (batch, n_inputs), dtype=jnp.float32)
    out = jax.block_until_ready(mlp_forward(x, w_stack, b_stack))
    ref = mlp_reference(x, weights, biases)
    assert out.shape == (batch, 41), out.shape
    scale = float(jnp.max(jnp.abs(ref)))
    assert jnp.allclose(out, ref, atol=1e-2 * scale + 1e-30, rtol=1e-2), \
        "mismatch vs reference (small batch)"

    # Multi-tile check: adaptive tiling picks tb=1264, bp=2528, grid=(2,)
    # (even steps, ~1% padding) and exercises padded tail rows.
    batch2 = 2500
    x2 = jax.random.normal(k_x2, (batch2, n_inputs), dtype=jnp.float32)
    out2 = jax.block_until_ready(mlp_forward(x2, w_stack, b_stack))
    ref2 = mlp_reference(x2, weights, biases)
    assert out2.shape == (batch2, 41), out2.shape
    scale2 = float(jnp.max(jnp.abs(ref2)))
    assert jnp.allclose(out2, ref2, atol=1e-2 * scale2 + 1e-30, rtol=1e-2), \
        "mismatch vs reference (multi-tile)"

    print("KERNEL_OK")
</pallas_src>

<mosaic_0001>
module attributes {stable_mosaic.version = 11 : i64} {
  func.func @mlp_kernel(%arg0: i32, %arg1: memref<32x128xbf16, #tpu.memory_space<vmem>>, %arg2: memref<16x128x128xbf16, #tpu.memory_space<vmem>>, %arg3: memref<16x128xf32, #tpu.memory_space<vmem>>, %arg4: memref<32x128xf32, #tpu.memory_space<vmem>>) attributes {dimension_semantics = [#tpu.dimension_semantics<parallel>], iteration_bounds = array<i64: 1>, scalar_prefetch = 0 : i64, scratch_operands = 0 : i64, tpu.core_type = #tpu.core_type<tc>, window_params = [{transform_indices = @transform_0, window_bounds = array<i64: 32, 128>}, {pipeline_mode = #tpu.pipeline_mode<synchronous>, transform_indices = @transform_1, window_bounds = array<i64: 16, 128, 128>}, {pipeline_mode = #tpu.pipeline_mode<synchronous>, transform_indices = @transform_2, window_bounds = array<i64: 16, 128>}, {transform_indices = @transform_3, window_bounds = array<i64: 32, 128>}]} {
    %c0 = arith.constant 0 : index
    %c0_0 = arith.constant 0 : index
    %0 = vector.load %arg1[%c0, %c0_0] : memref<32x128xbf16, #tpu.memory_space<vmem>>, vector<16x128xbf16>
    %c16 = arith.constant 16 : index
    %c0_1 = arith.constant 0 : index
    %1 = vector.load %arg1[%c16, %c0_1] : memref<32x128xbf16, #tpu.memory_space<vmem>>, vector<16x128xbf16>
    %c0_2 = arith.constant 0 : index
    %c0_3 = arith.constant 0 : index
    %2 = vector.load %arg3[%c0_2, %c0_3] : memref<16x128xf32, #tpu.memory_space<vmem>>, vector<16x128xf32>
    %c0_4 = arith.constant 0 : index
    %c0_5 = arith.constant 0 : index
    %c0_6 = arith.constant 0 : index
    %3 = vector.load %arg2[%c0_4, %c0_5, %c0_6] : memref<16x128x128xbf16, #tpu.memory_space<vmem>>, vector<1x128x128xbf16>
    %4 = vector.shape_cast %3 : vector<1x128x128xbf16> to vector<128x128xbf16>
    %5 = vector.extract_strided_slice %2 {offsets = [0, 0], sizes = [1, 128], strides = [1, 1]} : vector<16x128xf32> to vector<1x128xf32>
    %6 = vector.shape_cast %5 : vector<1x128xf32> to vector<128xf32>
    %7 = vector.shape_cast %6 : vector<128xf32> to vector<1x128xf32>
    %cst = arith.constant dense<0.000000e+00> : vector<16x128xf32>
    %8 = tpu.matmul %0, %4, %cst {dimension_numbers = #tpu.dot_dimension_numbers<[1], [0], [0], [1], [0, 0, 1, 1], [], []>} : vector<16x128xbf16>, vector<128x128xbf16>, vector<16x128xf32> -> vector<16x128xf32>
    %9 = vector.broadcast %7 : vector<1x128xf32> to vector<16x128xf32>
    %10 = arith.addf %8, %9 : vector<16x128xf32>
    %cst_7 = arith.constant 0.000000e+00 : f32
    %11 = vector.broadcast %cst_7 : f32 to vector<16x128xf32>
    %12 = arith.maximumf %10, %11 : vector<16x128xf32>
    %13 = arith.truncf %12 : vector<16x128xf32> to vector<16x128xbf16>
    %cst_8 = arith.constant dense<0.000000e+00> : vector<16x128xf32>
    %14 = tpu.matmul %1, %4, %cst_8 {dimension_numbers = #tpu.dot_dimension_numbers<[1], [0], [0], [1], [0, 0, 1, 1], [], []>} : vector<16x128xbf16>, vector<128x128xbf16>, vector<16x128xf32> -> vector<16x128xf32>
    %15 = vector.broadcast %7 : vector<1x128xf32> to vector<16x128xf32>
    %16 = arith.addf %14, %15 : vector<16x128xf32>
    %cst_9 = arith.constant 0.000000e+00 : f32
    %17 = vector.broadcast %cst_9 : f32 to vector<16x128xf32>
    %18 = arith.maximumf %16, %17 : vector<16x128xf32>
    %19 = arith.truncf %18 : vector<16x128xf32> to vector<16x128xbf16>
    %c1 = arith.constant 1 : index
    %c0_10 = arith.constant 0 : index
    %c0_11 = arith.constant 0 : index
    %20 = vector.load %arg2[%c1, %c0_10, %c0_11] : memref<16x128x128xbf16, #tpu.memory_space<vmem>>, vector<1x128x128xbf16>
    %21 = vector.shape_cast %20 : vector<1x128x128xbf16> to vector<128x128xbf16>
    %22 = vector.extract_strided_slice %2 {offsets = [1, 0], sizes = [1, 128], strides = [1, 1]} : vector<16x128xf32> to vector<1x128xf32>
    %23 = vector.shape_cast %22 : vector<1x128xf32> to vector<128xf32>
    %24 = vector.shape_cast %23 : vector<128xf32> to vector<1x128xf32>
    %cst_12 = arith.constant dense<0.000000e+00> : vector<16x128xf32>
    %25 = tpu.matmul %13, %21, %cst_12 {dimension_numbers = #tpu.dot_dimension_numbers<[1], [0], [0], [1], [0, 0, 1, 1], [], []>} : vector<16x128xbf16>, vector<128x128xbf16>, vector<16x128xf32> -> vector<16x128xf32>
    %26 = vector.broadcast %24 : vector<1x128xf32> to vector<16x128xf32>
    %27 = arith.addf %25, %26 : vector<16x128xf32>
    %cst_13 = arith.constant 0.000000e+00 : f32
    %28 = vector.broadcast %cst_13 : f32 to vector<16x128xf32>
    %29 = arith.maximumf %27, %28 : vector<16x128xf32>
    %30 = arith.truncf %29 : vector<16x128xf32> to vector<16x128xbf16>
    %cst_14 = arith.constant dense<0.000000e+00> : vector<16x128xf32>
    %31 = tpu.matmul %19, %21, %cst_14 {dimension_numbers = #tpu.dot_dimension_numbers<[1], [0], [0], [1], [0, 0, 1, 1], [], []>} : vector<16x128xbf16>, vector<128x128xbf16>, vector<16x128xf32> -> vector<16x128xf32>
    %32 = vector.broadcast %24 : vector<1x128xf32> to vector<16x128xf32>
    %33 = arith.addf %31, %32 : vector<16x128xf32>
    %cst_15 = arith.constant 0.000000e+00 : f32
    %34 = vector.broadcast %cst_15 : f32 to vector<16x128xf32>
    %35 = arith.maximumf %33, %34 : vector<16x128xf32>
    %36 = arith.truncf %35 : vector<16x128xf32> to vector<16x128xbf16>
    %c2 = arith.constant 2 : index
    %c0_16 = arith.constant 0 : index
    %c0_17 = arith.constant 0 : index
    %37 = vector.load %arg2[%c2, %c0_16, %c0_17] : memref<16x128x128xbf16, #tpu.memory_space<vmem>>, vector<1x128x128xbf16>
    %38 = vector.shape_cast %37 : vector<1x128x128xbf16> to vector<128x128xbf16>
    %39 = vector.extract_strided_slice %2 {offsets = [2, 0], sizes = [1, 128], strides = [1, 1]} : vector<16x128xf32> to vector<1x128xf32>
    %40 = vector.shape_cast %39 : vector<1x128xf32> to vector<128xf32>
    %41 = vector.shape_cast %40 : vector<128xf32> to vector<1x128xf32>
    %cst_18 = arith.constant dense<0.000000e+00> : vector<16x128xf32>
    %42 = tpu.matmul %30, %38, %cst_18 {dimension_numbers = #tpu.dot_dimension_numbers<[1], [0], [0], [1], [0, 0, 1, 1], [], []>} : vector<16x128xbf16>, vector<128x128xbf16>, vector<16x128xf32> -> vector<16x128xf32>
    %43 = vector.broadcast %41 : vector<1x128xf32> to vector<16x128xf32>
    %44 = arith.addf %42, %43 : vector<16x128xf32>
    %cst_19 = arith.constant 0.000000e+00 : f32
    %45 = vector.broadcast %cst_19 : f32 to vector<16x128xf32>
    %46 = arith.maximumf %44, %45 : vector<16x128xf32>
    %47 = arith.truncf %46 : vector<16x128xf32> to vector<16x128xbf16>
    %cst_20 = arith.constant dense<0.000000e+00> : vector<16x128xf32>
    %48 = tpu.matmul %36, %38, %cst_20 {dimension_numbers = #tpu.dot_dimension_numbers<[1], [0], [0], [1], [0, 0, 1, 1], [], []>} : vector<16x128xbf16>, vector<128x128xbf16>, vector<16x128xf32> -> vector<16x128xf32>
    %49 = vector.broadcast %41 : vector<1x128xf32> to vector<16x128xf32>
    %50 = arith.addf %48, %49 : vector<16x128xf32>
    %cst_21 = arith.constant 0.000000e+00 : f32
    %51 = vector.broadcast %cst_21 : f32 to vector<16x128xf32>
    %52 = arith.maximumf %50, %51 : vector<16x128xf32>
    %53 = arith.truncf %52 : vector<16x128xf32> to vector<16x128xbf16>
    %c3 = arith.constant 3 : index
    %c0_22 = arith.constant 0 : index
    %c0_23 = arith.constant 0 : index
    %54 = vector.load %arg2[%c3, %c0_22, %c0_23] : memref<16x128x128xbf16, #tpu.memory_space<vmem>>, vector<1x128x128xbf16>
    %55 = vector.shape_cast %54 : vector<1x128x128xbf16> to vector<128x128xbf16>
    %56 = vector.extract_strided_slice %2 {offsets = [3, 0], sizes = [1, 128], strides = [1, 1]} : vector<16x128xf32> to vector<1x128xf32>
    %57 = vector.shape_cast %56 : vector<1x128xf32> to vector<128xf32>
    %58 = vector.shape_cast %57 : vector<128xf32> to vector<1x128xf32>
    %cst_24 = arith.constant dense<0.000000e+00> : vector<16x128xf32>
    %59 = tpu.matmul %47, %55, %cst_24 {dimension_numbers = #tpu.dot_dimension_numbers<[1], [0], [0], [1], [0, 0, 1, 1], [], []>} : vector<16x128xbf16>, vector<128x128xbf16>, vector<16x128xf32> -> vector<16x128xf32>
    %60 = vector.broadcast %58 : vector<1x128xf32> to vector<16x128xf32>
    %61 = arith.addf %59, %60 : vector<16x128xf32>
    %cst_25 = arith.constant 0.000000e+00 : f32
    %62 = vector.broadcast %cst_25 : f32 to vector<16x128xf32>
    %63 = arith.maximumf %61, %62 : vector<16x128xf32>
    %64 = arith.truncf %63 : vector<16x128xf32> to vector<16x128xbf16>
    %cst_26 = arith.constant dense<0.000000e+00> : vector<16x128xf32>
    %65 = tpu.matmul %53, %55, %cst_26 {dimension_numbers = #tpu.dot_dimension_numbers<[1], [0], [0], [1], [0, 0, 1, 1], [], []>} : vector<16x128xbf16>, vector<128x128xbf16>, vector<16x128xf32> -> vector<16x128xf32>
    %66 = vector.broadcast %58 : vector<1x128xf32> to vector<16x128xf32>
    %67 = arith.addf %65, %66 : vector<16x128xf32>
    %cst_27 = arith.constant 0.000000e+00 : f32
    %68 = vector.broadcast %cst_27 : f32 to vector<16x128xf32>
    %69 = arith.maximumf %67, %68 : vector<16x128xf32>
    %70 = arith.truncf %69 : vector<16x128xf32> to vector<16x128xbf16>
    %c4 = arith.constant 4 : index
    %c0_28 = arith.constant 0 : index
    %c0_29 = arith.constant 0 : index
    %71 = vector.load %arg2[%c4, %c0_28, %c0_29] : memref<16x128x128xbf16, #tpu.memory_space<vmem>>, vector<1x128x128xbf16>
    %72 = vector.shape_cast %71 : vector<1x128x128xbf16> to vector<128x128xbf16>
    %73 = vector.extract_strided_slice %2 {offsets = [4, 0], sizes = [1, 128], strides = [1, 1]} : vector<16x128xf32> to vector<1x128xf32>
    %74 = vector.shape_cast %73 : vector<1x128xf32> to vector<128xf32>
    %75 = vector.shape_cast %74 : vector<128xf32> to vector<1x128xf32>
    %cst_30 = arith.constant dense<0.000000e+00> : vector<16x128xf32>
    %76 = tpu.matmul %64, %72, %cst_30 {dimension_numbers = #tpu.dot_dimension_numbers<[1], [0], [0], [1], [0, 0, 1, 1], [], []>} : vector<16x128xbf16>, vector<128x128xbf16>, vector<16x128xf32> -> vector<16x128xf32>
    %77 = vector.broadcast %75 : vector<1x128xf32> to vector<16x128xf32>
    %78 = arith.addf %76, %77 : vector<16x128xf32>
    %cst_31 = arith.constant 0.000000e+00 : f32
    %79 = vector.broadcast %cst_31 : f32 to vector<16x128xf32>
    %80 = arith.maximumf %78, %79 : vector<16x128xf32>
    %81 = arith.truncf %80 : vector<16x128xf32> to vector<16x128xbf16>
    %cst_32 = arith.constant dense<0.000000e+00> : vector<16x128xf32>
    %82 = tpu.matmul %70, %72, %cst_32 {dimension_numbers = #tpu.dot_dimension_numbers<[1], [0], [0], [1], [0, 0, 1, 1], [], []>} : vector<16x128xbf16>, vector<128x128xbf16>, vector<16x128xf32> -> vector<16x128xf32>
    %83 = vector.broadcast %75 : vector<1x128xf32> to vector<16x128xf32>
    %84 = arith.addf %82, %83 : vector<16x128xf32>
    %cst_33 = arith.constant 0.000000e+00 : f32
    %85 = vector.broadcast %cst_33 : f32 to vector<16x128xf32>
    %86 = arith.maximumf %84, %85 : vector<16x128xf32>
    %87 = arith.truncf %86 : vector<16x128xf32> to vector<16x128xbf16>
    %c5 = arith.constant 5 : index
    %c0_34 = arith.constant 0 : index
    %c0_35 = arith.constant 0 : index
    %88 = vector.load %arg2[%c5, %c0_34, %c0_35] : memref<16x128x128xbf16, #tpu.memory_space<vmem>>, vector<1x128x128xbf16>
    %89 = vector.shape_cast %88 : vector<1x128x128xbf16> to vector<128x128xbf16>
    %90 = vector.extract_strided_slice %2 {offsets = [5, 0], sizes = [1, 128], strides = [1, 1]} : vector<16x128xf32> to vector<1x128xf32>
    %91 = vector.shape_cast %90 : vector<1x128xf32> to vector<128xf32>
    %92 = vector.shape_cast %91 : vector<128xf32> to vector<1x128xf32>
    %cst_36 = arith.constant dense<0.000000e+00> : vector<16x128xf32>
    %93 = tpu.matmul %81, %89, %cst_36 {dimension_numbers = #tpu.dot_dimension_numbers<[1], [0], [0], [1], [0, 0, 1, 1], [], []>} : vector<16x128xbf16>, vector<128x128xbf16>, vector<16x128xf32> -> vector<16x128xf32>
    %94 = vector.broadcast %92 : vector<1x128xf32> to vector<16x128xf32>
    %95 = arith.addf %93, %94 : vector<16x128xf32>
    %cst_37 = arith.constant 0.000000e+00 : f32
    %96 = vector.broadcast %cst_37 : f32 to vector<16x128xf32>
    %97 = arith.maximumf %95, %96 : vector<16x128xf32>
    %98 = arith.truncf %97 : vector<16x128xf32> to vector<16x128xbf16>
    %cst_38 = arith.constant dense<0.000000e+00> : vector<16x128xf32>
    %99 = tpu.matmul %87, %89, %cst_38 {dimension_numbers = #tpu.dot_dimension_numbers<[1], [0], [0], [1], [0, 0, 1, 1], [], []>} : vector<16x128xbf16>, vector<128x128xbf16>, vector<16x128xf32> -> vector<16x128xf32>
    %100 = vector.broadcast %92 : vector<1x128xf32> to vector<16x128xf32>
    %101 = arith.addf %99, %100 : vector<16x128xf32>
    %cst_39 = arith.constant 0.000000e+00 : f32
    %102 = vector.broadcast %cst_39 : f32 to vector<16x128xf32>
    %103 = arith.maximumf %101, %102 : vector<16x128xf32>
    %104 = arith.truncf %103 : vector<16x128xf32> to vector<16x128xbf16>
    %c6 = arith.constant 6 : index
    %c0_40 = arith.constant 0 : index
    %c0_41 = arith.constant 0 : index
    %105 = vector.load %arg2[%c6, %c0_40, %c0_41] : memref<16x128x128xbf16, #tpu.memory_space<vmem>>, vector<1x128x128xbf16>
    %106 = vector.shape_cast %105 : vector<1x128x128xbf16> to vector<128x128xbf16>
    %107 = vector.extract_strided_slice %2 {offsets = [6, 0], sizes = [1, 128], strides = [1, 1]} : vector<16x128xf32> to vector<1x128xf32>
    %108 = vector.shape_cast %107 : vector<1x128xf32> to vector<128xf32>
    %109 = vector.shape_cast %108 : vector<128xf32> to vector<1x128xf32>
    %cst_42 = arith.constant dense<0.000000e+00> : vector<16x128xf32>
    %110 = tpu.matmul %98, %106, %cst_42 {dimension_numbers = #tpu.dot_dimension_numbers<[1], [0], [0], [1], [0, 0, 1, 1], [], []>} : vector<16x128xbf16>, vector<128x128xbf16>, vector<16x128xf32> -> vector<16x128xf32>
    %111 = vector.broadcast %109 : vector<1x128xf32> to vector<16x128xf32>
    %112 = arith.addf %110, %111 : vector<16x128xf32>
    %cst_43 = arith.constant 0.000000e+00 : f32
    %113 = vector.broadcast %cst_43 : f32 to vector<16x128xf32>
    %114 = arith.maximumf %112, %113 : vector<16x128xf32>
    %115 = arith.truncf %114 : vector<16x128xf32> to vector<16x128xbf16>
    %cst_44 = arith.constant dense<0.000000e+00> : vector<16x128xf32>
    %116 = tpu.matmul %104, %106, %cst_44 {dimension_numbers = #tpu.dot_dimension_numbers<[1], [0], [0], [1], [0, 0, 1, 1], [], []>} : vector<16x128xbf16>, vector<128x128xbf16>, vector<16x128xf32> -> vector<16x128xf32>
    %117 = vector.broadcast %109 : vector<1x128xf32> to vector<16x128xf32>
    %118 = arith.addf %116, %117 : vector<16x128xf32>
    %cst_45 = arith.constant 0.000000e+00 : f32
    %119 = vector.broadcast %cst_45 : f32 to vector<16x128xf32>
    %120 = arith.maximumf %118, %119 : vector<16x128xf32>
    %121 = arith.truncf %120 : vector<16x128xf32> to vector<16x128xbf16>
    %c7 = arith.constant 7 : index
    %c0_46 = arith.constant 0 : index
    %c0_47 = arith.constant 0 : index
    %122 = vector.load %arg2[%c7, %c0_46, %c0_47] : memref<16x128x128xbf16, #tpu.memory_space<vmem>>, vector<1x128x128xbf16>
    %123 = vector.shape_cast %122 : vector<1x128x128xbf16> to vector<128x128xbf16>
    %124 = vector.extract_strided_slice %2 {offsets = [7, 0], sizes = [1, 128], strides = [1, 1]} : vector<16x128xf32> to vector<1x128xf32>
    %125 = vector.shape_cast %124 : vector<1x128xf32> to vector<128xf32>
    %126 = vector.shape_cast %125 : vector<128xf32> to vector<1x128xf32>
    %cst_48 = arith.constant dense<0.000000e+00> : vector<16x128xf32>
    %127 = tpu.matmul %115, %123, %cst_48 {dimension_numbers = #tpu.dot_dimension_numbers<[1], [0], [0], [1], [0, 0, 1, 1], [], []>} : vector<16x128xbf16>, vector<128x128xbf16>, vector<16x128xf32> -> vector<16x128xf32>
    %128 = vector.broadcast %126 : vector<1x128xf32> to vector<16x128xf32>
    %129 = arith.addf %127, %128 : vector<16x128xf32>
    %cst_49 = arith.constant 0.000000e+00 : f32
    %130 = vector.broadcast %cst_49 : f32 to vector<16x128xf32>
    %131 = arith.maximumf %129, %130 : vector<16x128xf32>
    %132 = arith.truncf %131 : vector<16x128xf32> to vector<16x128xbf16>
    %cst_50 = arith.constant dense<0.000000e+00> : vector<16x128xf32>
    %133 = tpu.matmul %121, %123, %cst_50 {dimension_numbers = #tpu.dot_dimension_numbers<[1], [0], [0], [1], [0, 0, 1, 1], [], []>} : vector<16x128xbf16>, vector<128x128xbf16>, vector<16x128xf32> -> vector<16x128xf32>
    %134 = vector.broadcast %126 : vector<1x128xf32> to vector<16x128xf32>
    %135 = arith.addf %133, %134 : vector<16x128xf32>
    %cst_51 = arith.constant 0.000000e+00 : f32
    %136 = vector.broadcast %cst_51 : f32 to vector<16x128xf32>
    %137 = arith.maximumf %135, %136 : vector<16x128xf32>
    %138 = arith.truncf %137 : vector<16x128xf32> to vector<16x128xbf16>
    %c8 = arith.constant 8 : index
    %c0_52 = arith.constant 0 : index
    %c0_53 = arith.constant 0 : index
    %139 = vector.load %arg2[%c8, %c0_52, %c0_53] : memref<16x128x128xbf16, #tpu.memory_space<vmem>>, vector<1x128x128xbf16>
    %140 = vector.shape_cast %139 : vector<1x128x128xbf16> to vector<128x128xbf16>
    %141 = vector.extract_strided_slice %2 {offsets = [8, 0], sizes = [1, 128], strides = [1, 1]} : vector<16x128xf32> to vector<1x128xf32>
    %142 = vector.shape_cast %141 : vector<1x128xf32> to vector<128xf32>
    %143 = vector.shape_cast %142 : vector<128xf32> to vector<1x128xf32>
    %cst_54 = arith.constant dense<0.000000e+00> : vector<16x128xf32>
    %144 = tpu.matmul %132, %140, %cst_54 {dimension_numbers = #tpu.dot_dimension_numbers<[1], [0], [0], [1], [0, 0, 1, 1], [], []>} : vector<16x128xbf16>, vector<128x128xbf16>, vector<16x128xf32> -> vector<16x128xf32>
    %145 = vector.broadcast %143 : vector<1x128xf32> to vector<16x128xf32>
    %146 = arith.addf %144, %145 : vector<16x128xf32>
    %cst_55 = arith.constant 0.000000e+00 : f32
    %147 = vector.broadcast %cst_55 : f32 to vector<16x128xf32>
    %148 = arith.maximumf %146, %147 : vector<16x128xf32>
    %149 = arith.truncf %148 : vector<16x128xf32> to vector<16x128xbf16>
    %cst_56 = arith.constant dense<0.000000e+00> : vector<16x128xf32>
    %150 = tpu.matmul %138, %140, %cst_56 {dimension_numbers = #tpu.dot_dimension_numbers<[1], [0], [0], [1], [0, 0, 1, 1], [], []>} : vector<16x128xbf16>, vector<128x128xbf16>, vector<16x128xf32> -> vector<16x128xf32>
    %151 = vector.broadcast %143 : vector<1x128xf32> to vector<16x128xf32>
    %152 = arith.addf %150, %151 : vector<16x128xf32>
    %cst_57 = arith.constant 0.000000e+00 : f32
    %153 = vector.broadcast %cst_57 : f32 to vector<16x128xf32>
    %154 = arith.maximumf %152, %153 : vector<16x128xf32>
    %155 = arith.truncf %154 : vector<16x128xf32> to vector<16x128xbf16>
    %c9 = arith.constant 9 : index
    %c0_58 = arith.constant 0 : index
    %c0_59 = arith.constant 0 : index
    %156 = vector.load %arg2[%c9, %c0_58, %c0_59] : memref<16x128x128xbf16, #tpu.memory_space<vmem>>, vector<1x128x128xbf16>
    %157 = vector.shape_cast %156 : vector<1x128x128xbf16> to vector<128x128xbf16>
    %158 = vector.extract_strided_slice %2 {offsets = [9, 0], sizes = [1, 128], strides = [1, 1]} : vector<16x128xf32> to vector<1x128xf32>
    %159 = vector.shape_cast %158 : vector<1x128xf32> to vector<128xf32>
    %160 = vector.shape_cast %159 : vector<128xf32> to vector<1x128xf32>
    %cst_60 = arith.constant dense<0.000000e+00> : vector<16x128xf32>
    %161 = tpu.matmul %149, %157, %cst_60 {dimension_numbers = #tpu.dot_dimension_numbers<[1], [0], [0], [1], [0, 0, 1, 1], [], []>} : vector<16x128xbf16>, vector<128x128xbf16>, vector<16x128xf32> -> vector<16x128xf32>
    %162 = vector.broadcast %160 : vector<1x128xf32> to vector<16x128xf32>
    %163 = arith.addf %161, %162 : vector<16x128xf32>
    %cst_61 = arith.constant 0.000000e+00 : f32
    %164 = vector.broadcast %cst_61 : f32 to vector<16x128xf32>
    %165 = arith.maximumf %163, %164 : vector<16x128xf32>
    %166 = arith.truncf %165 : vector<16x128xf32> to vector<16x128xbf16>
    %cst_62 = arith.constant dense<0.000000e+00> : vector<16x128xf32>
    %167 = tpu.matmul %155, %157, %cst_62 {dimension_numbers = #tpu.dot_dimension_numbers<[1], [0], [0], [1], [0, 0, 1, 1], [], []>} : vector<16x128xbf16>, vector<128x128xbf16>, vector<16x128xf32> -> vector<16x128xf32>
    %168 = vector.broadcast %160 : vector<1x128xf32> to vector<16x128xf32>
    %169 = arith.addf %167, %168 : vector<16x128xf32>
    %cst_63 = arith.constant 0.000000e+00 : f32
    %170 = vector.broadcast %cst_63 : f32 to vector<16x128xf32>
    %171 = arith.maximumf %169, %170 : vector<16x128xf32>
    %172 = arith.truncf %171 : vector<16x128xf32> to vector<16x128xbf16>
    %c10 = arith.constant 10 : index
    %c0_64 = arith.constant 0 : index
    %c0_65 = arith.constant 0 : index
    %173 = vector.load %arg2[%c10, %c0_64, %c0_65] : memref<16x128x128xbf16, #tpu.memory_space<vmem>>, vector<1x128x128xbf16>
    %174 = vector.shape_cast %173 : vector<1x128x128xbf16> to vector<128x128xbf16>
    %175 = vector.extract_strided_slice %2 {offsets = [10, 0], sizes = [1, 128], strides = [1, 1]} : vector<16x128xf32> to vector<1x128xf32>
    %176 = vector.shape_cast %175 : vector<1x128xf32> to vector<128xf32>
    %177 = vector.shape_cast %176 : vector<128xf32> to vector<1x128xf32>
    %cst_66 = arith.constant dense<0.000000e+00> : vector<16x128xf32>
    %178 = tpu.matmul %166, %174, %cst_66 {dimension_numbers = #tpu.dot_dimension_numbers<[1], [0], [0], [1], [0, 0, 1, 1], [], []>} : vector<16x128xbf16>, vector<128x128xbf16>, vector<16x128xf32> -> vector<16x128xf32>
    %179 = vector.broadcast %177 : vector<1x128xf32> to vector<16x128xf32>
    %180 = arith.addf %178, %179 : vector<16x128xf32>
    %cst_67 = arith.constant 0.000000e+00 : f32
    %181 = vector.broadcast %cst_67 : f32 to vector<16x128xf32>
    %182 = arith.maximumf %180, %181 : vector<16x128xf32>
    %183 = arith.truncf %182 : vector<16x128xf32> to vector<16x128xbf16>
    %cst_68 = arith.constant dense<0.000000e+00> : vector<16x128xf32>
    %184 = tpu.matmul %172, %174, %cst_68 {dimension_numbers = #tpu.dot_dimension_numbers<[1], [0], [0], [1], [0, 0, 1, 1], [], []>} : vector<16x128xbf16>, vector<128x128xbf16>, vector<16x128xf32> -> vector<16x128xf32>
    %185 = vector.broadcast %177 : vector<1x128xf32> to vector<16x128xf32>
    %186 = arith.addf %184, %185 : vector<16x128xf32>
    %cst_69 = arith.constant 0.000000e+00 : f32
    %187 = vector.broadcast %cst_69 : f32 to vector<16x128xf32>
    %188 = arith.maximumf %186, %187 : vector<16x128xf32>
    %189 = arith.truncf %188 : vector<16x128xf32> to vector<16x128xbf16>
    %c11 = arith.constant 11 : index
    %c0_70 = arith.constant 0 : index
    %c0_71 = arith.constant 0 : index
    %190 = vector.load %arg2[%c11, %c0_70, %c0_71] : memref<16x128x128xbf16, #tpu.memory_space<vmem>>, vector<1x128x128xbf16>
    %191 = vector.shape_cast %190 : vector<1x128x128xbf16> to vector<128x128xbf16>
    %192 = vector.extract_strided_slice %2 {offsets = [11, 0], sizes = [1, 128], strides = [1, 1]} : vector<16x128xf32> to vector<1x128xf32>
    %193 = vector.shape_cast %192 : vector<1x128xf32> to vector<128xf32>
    %194 = vector.shape_cast %193 : vector<128xf32> to vector<1x128xf32>
    %cst_72 = arith.constant dense<0.000000e+00> : vector<16x128xf32>
    %195 = tpu.matmul %183, %191, %cst_72 {dimension_numbers = #tpu.dot_dimension_numbers<[1], [0], [0], [1], [0, 0, 1, 1], [], []>} : vector<16x128xbf16>, vector<128x128xbf16>, vector<16x128xf32> -> vector<16x128xf32>
    %196 = vector.broadcast %194 : vector<1x128xf32> to vector<16x128xf32>
    %197 = arith.addf %195, %196 : vector<16x128xf32>
    %cst_73 = arith.constant 0.000000e+00 : f32
    %198 = vector.broadcast %cst_73 : f32 to vector<16x128xf32>
    %199 = arith.maximumf %197, %198 : vector<16x128xf32>
    %200 = arith.truncf %199 : vector<16x128xf32> to vector<16x128xbf16>
    %cst_74 = arith.constant dense<0.000000e+00> : vector<16x128xf32>
    %201 = tpu.matmul %189, %191, %cst_74 {dimension_numbers = #tpu.dot_dimension_numbers<[1], [0], [0], [1], [0, 0, 1, 1], [], []>} : vector<16x128xbf16>, vector<128x128xbf16>, vector<16x128xf32> -> vector<16x128xf32>
    %202 = vector.broadcast %194 : vector<1x128xf32> to vector<16x128xf32>
    %203 = arith.addf %201, %202 : vector<16x128xf32>
    %cst_75 = arith.constant 0.000000e+00 : f32
    %204 = vector.broadcast %cst_75 : f32 to vector<16x128xf32>
    %205 = arith.maximumf %203, %204 : vector<16x128xf32>
    %206 = arith.truncf %205 : vector<16x128xf32> to vector<16x128xbf16>
    %c12 = arith.constant 12 : index
    %c0_76 = arith.constant 0 : index
    %c0_77 = arith.constant 0 : index
    %207 = vector.load %arg2[%c12, %c0_76, %c0_77] : memref<16x128x128xbf16, #tpu.memory_space<vmem>>, vector<1x128x128xbf16>
    %208 = vector.shape_cast %207 : vector<1x128x128xbf16> to vector<128x128xbf16>
    %209 = vector.extract_strided_slice %2 {offsets = [12, 0], sizes = [1, 128], strides = [1, 1]} : vector<16x128xf32> to vector<1x128xf32>
    %210 = vector.shape_cast %209 : vector<1x128xf32> to vector<128xf32>
    %211 = vector.shape_cast %210 : vector<128xf32> to vector<1x128xf32>
    %cst_78 = arith.constant dense<0.000000e+00> : vector<16x128xf32>
    %212 = tpu.matmul %200, %208, %cst_78 {dimension_numbers = #tpu.dot_dimension_numbers<[1], [0], [0], [1], [0, 0, 1, 1], [], []>} : vector<16x128xbf16>, vector<128x128xbf16>, vector<16x128xf32> -> vector<16x128xf32>
    %213 = vector.broadcast %211 : vector<1x128xf32> to vector<16x128xf32>
    %214 = arith.addf %212, %213 : vector<16x128xf32>
    %cst_79 = arith.constant 0.000000e+00 : f32
    %215 = vector.broadcast %cst_79 : f32 to vector<16x128xf32>
    %216 = arith.maximumf %214, %215 : vector<16x128xf32>
    %217 = arith.truncf %216 : vector<16x128xf32> to vector<16x128xbf16>
    %cst_80 = arith.constant dense<0.000000e+00> : vector<16x128xf32>
    %218 = tpu.matmul %206, %208, %cst_80 {dimension_numbers = #tpu.dot_dimension_numbers<[1], [0], [0], [1], [0, 0, 1, 1], [], []>} : vector<16x128xbf16>, vector<128x128xbf16>, vector<16x128xf32> -> vector<16x128xf32>
    %219 = vector.broadcast %211 : vector<1x128xf32> to vector<16x128xf32>
    %220 = arith.addf %218, %219 : vector<16x128xf32>
    %cst_81 = arith.constant 0.000000e+00 : f32
    %221 = vector.broadcast %cst_81 : f32 to vector<16x128xf32>
    %222 = arith.maximumf %220, %221 : vector<16x128xf32>
    %223 = arith.truncf %222 : vector<16x128xf32> to vector<16x128xbf16>
    %c13 = arith.constant 13 : index
    %c0_82 = arith.constant 0 : index
    %c0_83 = arith.constant 0 : index
    %224 = vector.load %arg2[%c13, %c0_82, %c0_83] : memref<16x128x128xbf16, #tpu.memory_space<vmem>>, vector<1x128x128xbf16>
    %225 = vector.shape_cast %224 : vector<1x128x128xbf16> to vector<128x128xbf16>
    %226 = vector.extract_strided_slice %2 {offsets = [13, 0], sizes = [1, 128], strides = [1, 1]} : vector<16x128xf32> to vector<1x128xf32>
    %227 = vector.shape_cast %226 : vector<1x128xf32> to vector<128xf32>
    %228 = vector.shape_cast %227 : vector<128xf32> to vector<1x128xf32>
    %cst_84 = arith.constant dense<0.000000e+00> : vector<16x128xf32>
    %229 = tpu.matmul %217, %225, %cst_84 {dimension_numbers = #tpu.dot_dimension_numbers<[1], [0], [0], [1], [0, 0, 1, 1], [], []>} : vector<16x128xbf16>, vector<128x128xbf16>, vector<16x128xf32> -> vector<16x128xf32>
    %230 = vector.broadcast %228 : vector<1x128xf32> to vector<16x128xf32>
    %231 = arith.addf %229, %230 : vector<16x128xf32>
    %cst_85 = arith.constant 0.000000e+00 : f32
    %232 = vector.broadcast %cst_85 : f32 to vector<16x128xf32>
    %233 = arith.maximumf %231, %232 : vector<16x128xf32>
    %234 = arith.truncf %233 : vector<16x128xf32> to vector<16x128xbf16>
    %cst_86 = arith.constant dense<0.000000e+00> : vector<16x128xf32>
    %235 = tpu.matmul %223, %225, %cst_86 {dimension_numbers = #tpu.dot_dimension_numbers<[1], [0], [0], [1], [0, 0, 1, 1], [], []>} : vector<16x128xbf16>, vector<128x128xbf16>, vector<16x128xf32> -> vector<16x128xf32>
    %236 = vector.broadcast %228 : vector<1x128xf32> to vector<16x128xf32>
    %237 = arith.addf %235, %236 : vector<16x128xf32>
    %cst_87 = arith.constant 0.000000e+00 : f32
    %238 = vector.broadcast %cst_87 : f32 to vector<16x128xf32>
    %239 = arith.maximumf %237, %238 : vector<16x128xf32>
    %240 = arith.truncf %239 : vector<16x128xf32> to vector<16x128xbf16>
    %c14 = arith.constant 14 : index
    %c0_88 = arith.constant 0 : index
    %c0_89 = arith.constant 0 : index
    %241 = vector.load %arg2[%c14, %c0_88, %c0_89] : memref<16x128x128xbf16, #tpu.memory_space<vmem>>, vector<1x128x128xbf16>
    %242 = vector.shape_cast %241 : vector<1x128x128xbf16> to vector<128x128xbf16>
    %243 = vector.extract_strided_slice %2 {offsets = [14, 0], sizes = [1, 128], strides = [1, 1]} : vector<16x128xf32> to vector<1x128xf32>
    %244 = vector.shape_cast %243 : vector<1x128xf32> to vector<128xf32>
    %245 = vector.shape_cast %244 : vector<128xf32> to vector<1x128xf32>
    %cst_90 = arith.constant dense<0.000000e+00> : vector<16x128xf32>
    %246 = tpu.matmul %234, %242, %cst_90 {dimension_numbers = #tpu.dot_dimension_numbers<[1], [0], [0], [1], [0, 0, 1, 1], [], []>} : vector<16x128xbf16>, vector<128x128xbf16>, vector<16x128xf32> -> vector<16x128xf32>
    %247 = vector.broadcast %245 : vector<1x128xf32> to vector<16x128xf32>
    %248 = arith.addf %246, %247 : vector<16x128xf32>
    %cst_91 = arith.constant 0.000000e+00 : f32
    %249 = vector.broadcast %cst_91 : f32 to vector<16x128xf32>
    %250 = arith.maximumf %248, %249 : vector<16x128xf32>
    %251 = arith.truncf %250 : vector<16x128xf32> to vector<16x128xbf16>
    %cst_92 = arith.constant dense<0.000000e+00> : vector<16x128xf32>
    %252 = tpu.matmul %240, %242, %cst_92 {dimension_numbers = #tpu.dot_dimension_numbers<[1], [0], [0], [1], [0, 0, 1, 1], [], []>} : vector<16x128xbf16>, vector<128x128xbf16>, vector<16x128xf32> -> vector<16x128xf32>
    %253 = vector.broadcast %245 : vector<1x128xf32> to vector<16x128xf32>
    %254 = arith.addf %252, %253 : vector<16x128xf32>
    %cst_93 = arith.constant 0.000000e+00 : f32
    %255 = vector.broadcast %cst_93 : f32 to vector<16x128xf32>
    %256 = arith.maximumf %254, %255 : vector<16x128xf32>
    %257 = arith.truncf %256 : vector<16x128xf32> to vector<16x128xbf16>
    %c15 = arith.constant 15 : index
    %c0_94 = arith.constant 0 : index
    %c0_95 = arith.constant 0 : index
    %258 = vector.load %arg2[%c15, %c0_94, %c0_95] : memref<16x128x128xbf16, #tpu.memory_space<vmem>>, vector<1x128x128xbf16>
    %259 = vector.shape_cast %258 : vector<1x128x128xbf16> to vector<128x128xbf16>
    %260 = vector.extract_strided_slice %2 {offsets = [15, 0], sizes = [1, 128], strides = [1, 1]} : vector<16x128xf32> to vector<1x128xf32>
    %261 = vector.shape_cast %260 : vector<1x128xf32> to vector<128xf32>
    %262 = vector.shape_cast %261 : vector<128xf32> to vector<1x128xf32>
    %cst_96 = arith.constant dense<0.000000e+00> : vector<16x128xf32>
    %263 = tpu.matmul %251, %259, %cst_96 {dimension_numbers = #tpu.dot_dimension_numbers<[1], [0], [0], [1], [0, 0, 1, 1], [], []>} : vector<16x128xbf16>, vector<128x128xbf16>, vector<16x128xf32> -> vector<16x128xf32>
    %264 = vector.broadcast %262 : vector<1x128xf32> to vector<16x128xf32>
    %265 = arith.addf %263, %264 : vector<16x128xf32>
    %cst_97 = arith.constant dense<0.000000e+00> : vector<16x128xf32>
    %266 = tpu.matmul %257, %259, %cst_97 {dimension_numbers = #tpu.dot_dimension_numbers<[1], [0], [0], [1], [0, 0, 1, 1], [], []>} : vector<16x128xbf16>, vector<128x128xbf16>, vector<16x128xf32> -> vector<16x128xf32>
    %267 = vector.broadcast %262 : vector<1x128xf32> to vector<16x128xf32>
    %268 = arith.addf %266, %267 : vector<16x128xf32>
    %c0_98 = arith.constant 0 : index
    %c0_99 = arith.constant 0 : index
    %269 = vector.load %arg4[%c0_98, %c0_99] : memref<32x128xf32, #tpu.memory_space<vmem>>, vector<16x128xf32>
    tpu.vector_store %arg4[%c0_98, %c0_99], %265 {strides = array<i32>} : memref<32x128xf32, #tpu.memory_space<vmem>>, vector<16x128xf32>,
    %c16_100 = arith.constant 16 : index
    %c0_101 = arith.constant 0 : index
    %270 = vector.load %arg4[%c16_100, %c0_101] : memref<32x128xf32, #tpu.memory_space<vmem>>, vector<16x128xf32>
    tpu.vector_store %arg4[%c16_100, %c0_101], %268 {strides = array<i32>} : memref<32x128xf32, #tpu.memory_space<vmem>>, vector<16x128xf32>,
    return
  }
  func.func @transform_0(%arg0: i32) -> (i32, i32) {
    %c0_i32 = arith.constant 0 : i32
    %c0_i32_0 = arith.constant 0 : i32
    return %arg0, %c0_i32 : i32, i32
  }
  func.func @transform_1(%arg0: i32) -> (i32, i32, i32) {
    %c0_i32 = arith.constant 0 : i32
    %c0_i32_0 = arith.constant 0 : i32
    %c0_i32_1 = arith.constant 0 : i32
    %c0_i32_2 = arith.constant 0 : i32
    return %c0_i32, %c0_i32_0, %c0_i32_1 : i32, i32, i32
  }
  func.func @transform_2(%arg0: i32) -> (i32, i32) {
    %c0_i32 = arith.constant 0 : i32
    %c0_i32_0 = arith.constant 0 : i32
    %c0_i32_1 = arith.constant 0 : i32
    return %c0_i32, %c0_i32_0 : i32, i32
  }
  func.func @transform_3(%arg0: i32) -> (i32, i32) {
    %c0_i32 = arith.constant 0 : i32
    %c0_i32_0 = arith.constant 0 : i32
    return %arg0, %c0_i32 : i32, i32
  }
}

</mosaic_0001>

<llo_original>
// kernel: tpu_custom_call.1
$region0: #{tpu_custom_call.1}
  #allocation0 [shape = 'u32[]', space=smem, size = 0x4, offset = 0x4, fixed_abs, tag = 'smem constant byte address 0x4 - core index']
  #allocation1 [shape = 'u32[144,128]{1,0:T(1,128)}', space=vmem, size = 0x12000, scoped, tag = 'internal scratch']
  %s0 = inlined_call_operand.hbm [shape: bf16[32,128], index: 0, kind: input, shape index: {}]
  %s1 = inlined_call_operand.hbm [shape: bf16[16,128,128], index: 1, kind: input, shape index: {}]
  %s2 = inlined_call_operand.hbm [shape: f32[16,128], index: 2, kind: input, shape index: {}]
  %s3 = inlined_call_operand.hbm [shape: f32[32,128], index: 3, kind: output, shape index: {}]
  %s4 = sld [smem:[#allocation0]]
  $region34: #{tpu_custom_call.1} parent=0
    _
  %s6 = ssub.s32 1, %s4
  %s7 = scalar_select 0, %s6, %s4
  $region1: #{tpu_custom_call.1} parent=0
    #allocation2 [shape = 'u8[8192]{0}', space=vmem, size = 0x2000, scoped, tag = 'input window, operand 0, single buffered']
    #allocation3 [shape = 's32[1]{0}', space=sflag, size = 0x4, scoped, tag = 'scoped memory for tpu_custom_call.1']
    #allocation4 [shape = 's32[1]{0}', space=sflag, size = 0x4, scoped, tag = 'scoped memory for tpu_custom_call.1']
    #allocation5 [shape = 'u8[524288]{0}', space=vmem, size = 0x80000, scoped, tag = 'input window, operand 1, single buffered']
    #allocation6 [shape = 's32[1]{0}', space=sflag, size = 0x4, scoped, tag = 'scoped memory for tpu_custom_call.1']
    #allocation7 [shape = 'u8[8192]{0}', space=vmem, size = 0x2000, scoped, tag = 'input window, operand 2, single buffered']
    #allocation8 [shape = 'u8[16384]{0}', space=vmem, size = 0x4000, scoped, tag = 'output window, operand 0, single buffered']
    %8 = vsyncpa [#allocation3], 0
    %9 = vsyncpa [#allocation6], 0
    %10 = vsyncpa [#allocation4], 0
    // Predicated region
    $region2: #{tpu_custom_call.1} parent=1 // pred_check
      _
    $region3: #{tpu_custom_call.1} parent=1 // pred_check_branch
      %12 = sbr.rel (0) target = $region5
    $region4: #{tpu_custom_call.1} parent=1 // pred_region
      %s14 = ssub.s32 256, 256
      %15 = vsyncadd [#allocation3], %s14
      %s16 = sshll.u32 [#allocation2], 4
      %s17 = int_to_ptr.vmem [resolvable:$true] %s16
      %22 = dma.hbm_to_vmem [thread:$0]  %s0, 256, %s17, [#allocation3], 64, 64, 4
    $region5: #{tpu_custom_call.1} parent=1 // pred_fallthru
      _
    // Predicated region
    $region6: #{tpu_custom_call.1} parent=1 // pred_check
      _
    $region7: #{tpu_custom_call.1} parent=1 // pred_check_branch
      %24 = sbr.rel (0) target = $region9
    $region8: #{tpu_custom_call.1} parent=1 // pred_region
      %s26 = ssub.s32 16384, 16384
      %27 = vsyncadd [#allocation6], %s26
      %s28 = sshll.u32 [#allocation5], 4
      %s29 = int_to_ptr.vmem [resolvable:$true] %s28
      %34 = dma.hbm_to_vmem [thread:$0]  %s1, 16384, %s29, [#allocation6], 64, 64, 4
    $region9: #{tpu_custom_call.1} parent=1 // pred_fallthru
      _
    // Predicated region
    $region10: #{tpu_custom_call.1} parent=1 // pred_check
      _
    $region11: #{tpu_custom_call.1} parent=1 // pred_check_branch
      %36 = sbr.rel (0) target = $region13
    $region12: #{tpu_custom_call.1} parent=1 // pred_region
      %s38 = ssub.s32 256, 256
      %39 = vsyncadd [#allocation6], %s38
      %s40 = sshll.u32 [#allocation7], 4
      %s41 = int_to_ptr.vmem [resolvable:$true] %s40
      %46 = dma.hbm_to_vmem [thread:$0]  %s2, 256, %s41, [#allocation6], 128, 128, 8
    $region13: #{tpu_custom_call.1} parent=1 // pred_fallthru
      _
    // Predicated region
    $region14: #{tpu_custom_call.1} parent=1 // pred_check
      _
    $region15: #{tpu_custom_call.1} parent=1 // pred_check_branch
      %48 = sbr.rel (0) target = $region17
    $region16: #{tpu_custom_call.1} parent=1 // pred_region
      %49 = dma.done [#allocation3], 256
    $region17: #{tpu_custom_call.1} parent=1 // pred_fallthru
      _
    // Predicated region
    $region18: #{tpu_custom_call.1} parent=1 // pred_check
      _
    $region19: #{tpu_custom_call.1} parent=1 // pred_check_branch
      %51 = sbr.rel (0) target = $region21
    $region20: #{tpu_custom_call.1} parent=1 // pred_region
      %52 = dma.done [#allocation6], 16384
    $region21: #{tpu_custom_call.1} parent=1 // pred_fallthru
      _
    // Predicated region
    $region22: #{tpu_custom_call.1} parent=1 // pred_check
      _
    $region23: #{tpu_custom_call.1} parent=1 // pred_check_branch
      %54 = sbr.rel (0) target = $region25
    $region24: #{tpu_custom_call.1} parent=1 // pred_region
      %55 = dma.done [#allocation6], 256
    $region25: #{tpu_custom_call.1} parent=1 // pred_fallthru
      _
    %v57 = vld [vmem:[#allocation2] sm:$0xf]
    %v58 = vld [vmem:[#allocation2 + $0x4] sm:$0xf]
    %v59 = vld [vmem:[#allocation2 + $0x8] sm:$0xf]
    %v60 = vld [vmem:[#allocation2 + $0xc] sm:$0xf]
    %v61 = vld [vmem:[#allocation7] sm:$0xff]
    %v62 = vld [vmem:[#allocation7 + $0x8] sm:$0xff]
    %v63 = vld [vmem:[#allocation5] sm:$0xf]
    %v64 = vld [vmem:[#allocation5 + $0x4] sm:$0xf]
    %v65 = vld [vmem:[#allocation5 + $0x8] sm:$0xf]
    %v66 = vld [vmem:[#allocation5 + $0xc] sm:$0xf]
    %v67 = vld [vmem:[#allocation5 + $0x10] sm:$0xf]
    %v68 = vld [vmem:[#allocation5 + $0x14] sm:$0xf]
    %v69 = vld [vmem:[#allocation5 + $0x18] sm:$0xf]
    %v70 = vld [vmem:[#allocation5 + $0x1c] sm:$0xf]
    %v71 = vld [vmem:[#allocation5 + $0x20] sm:$0xf]
    %v72 = vld [vmem:[#allocation5 + $0x24] sm:$0xf]
    %v73 = vld [vmem:[#allocation5 + $0x28] sm:$0xf]
    %v74 = vld [vmem:[#allocation5 + $0x2c] sm:$0xf]
    %v75 = vld [vmem:[#allocation5 + $0x30] sm:$0xf]
    %v76 = vld [vmem:[#allocation5 + $0x34] sm:$0xf]
    %v77 = vld [vmem:[#allocation5 + $0x38] sm:$0xf]
    %v78 = vld [vmem:[#allocation5 + $0x3c] sm:$0xf]
    %v79 = vlaneseq
    %v80 = vshrl.u32 %v79, 7
    %v81 = vsub.s32 0, %v80
    %v82 = vrot.slane %v61, %v81
    %v85 = vunpack.c.l.b16 %v57
    %v86 = vunpack.c.l.b16 %v58
    %v87 = vpack.c.b16 %v86, %v85
    %v105 = vunpack.c.l.b16 %v63
    %v106 = vunpack.c.l.b16 %v64
    %v107 = vunpack.c.l.b16 %v65
    %v108 = vunpack.c.l.b16 %v66
    %v109 = vunpack.c.l.b16 %v67
    %v110 = vunpack.c.l.b16 %v68
    %v111 = vunpack.c.l.b16 %v69
    %v112 = vunpack.c.l.b16 %v70
    %v113 = vunpack.c.l.b16 %v71
    %v114 = vunpack.c.l.b16 %v72
    %v115 = vunpack.c.l.b16 %v73
    %v116 = vunpack.c.l.b16 %v74
    %v117 = vunpack.c.l.b16 %v75
    %v118 = vunpack.c.l.b16 %v76
    %v119 = vunpack.c.l.b16 %v77
    %v120 = vunpack.c.l.b16 %v78
    %v121 = vpack.c.b16 %v106, %v105
    %v122 = vpack.c.b16 %v108, %v107
    %v123 = vpack.c.b16 %v110, %v109
    %v124 = vpack.c.b16 %v112, %v111
    %v125 = vpack.c.b16 %v114, %v113
    %v126 = vpack.c.b16 %v116, %v115
    %v127 = vpack.c.b16 %v118, %v117
    %v128 = vpack.c.b16 %v120, %v119
    %137 = vmatprep.subr.bf16.mxu0 0
    %138 = vmatpush1.bf16.msra.mxu0 %v121
    %139 = vmatprep.subr.bf16.mxu0 0
    %140 = vmatpush1.bf16.msra.mxu0 %v122
    %141 = vmatprep.subr.bf16.mxu0 0
    %142 = vmatpush1.bf16.msra.mxu0 %v123
    %143 = vmatprep.subr.bf16.mxu0 0
    %144 = vmatpush1.bf16.msra.mxu0 %v124
    %145 = vmatprep.subr.bf16.mxu0 0
    %146 = vmatpush1.bf16.msra.mxu0 %v125
    %147 = vmatprep.subr.bf16.mxu0 0
    %148 = vmatpush1.bf16.msra.mxu0 %v126
    %149 = vmatprep.subr.bf16.mxu0 0
    %150 = vmatpush1.bf16.msra.mxu0 %v127
    %151 = vmatprep.subr.bf16.mxu0 0
    %152 = vmatpush1.bf16.msra.mxu0 %v128
    %153 = vmatprep.subr.bf16.mxu0 0
    %154 = vmatpush1.bf16.msra.mxu0 0
    %155 = vmatprep.subr.bf16.mxu0 0
    %156 = vmatpush1.bf16.msra.mxu0 0
    %157 = vmatprep.subr.bf16.mxu0 0
    %158 = vmatpush1.bf16.msra.mxu0 0
    %159 = vmatprep.subr.bf16.mxu0 0
    %160 = vmatpush1.bf16.msra.mxu0 0
    %161 = vmatprep.subr.bf16.mxu0 0
    %162 = vmatpush1.bf16.msra.mxu0 0
    %163 = vmatprep.subr.bf16.mxu0 0
    %164 = vmatpush1.bf16.msra.mxu0 0
    %165 = vmatprep.subr.bf16.mxu0 0
    %166 = vmatpush1.bf16.msra.mxu0 0
    %167 = vmatprep.subr.bf16.mxu0 0
    %168 = vmatpush1.bf16.msra.mxu0 0
    %169 = vmatprep.mubr.bf16.mxu0 0
    %170 = vmatmul.mubr.bf16.gmra.mrb[0].mxu0 %v87
    %v171 = vpop.f32.mrb[0].mxu0
    %v172 = vadd.f32 %v82, %v171
    %v173 = vpop.f32.mrb[0].mxu0
    %v174 = vpop.f32.mrb[0].mxu0
    %v175 = vadd.f32 %v82, %v174
    %v176 = vpop.f32.mrb[0].mxu0
    %177 = vdwg.mxu0
    %v178 = vmax.f32 %v172, 0.0
    %v179 = vmax.f32 %v175, 0.0
    %v180 = vpack.c.bf16 %v179, %v178
    %v183 = vunpack.c.l.b16 %v59
    %v184 = vunpack.c.l.b16 %v60
    %v185 = vpack.c.b16 %v184, %v183
    %187 = vmatprep.subr.bf16.mxu0 0
    %188 = vmatpush1.bf16.msra.mxu0 %v121
    %189 = vmatprep.subr.bf16.mxu0 0
    %190 = vmatpush1.bf16.msra.mxu0 %v122
    %191 = vmatprep.subr.bf16.mxu0 0
    %192 = vmatpush1.bf16.msra.mxu0 %v123
    %193 = vmatprep.subr.bf16.mxu0 0
    %194 = vmatpush1.bf16.msra.mxu0 %v124
    %195 = vmatprep.subr.bf16.mxu0 0
    %196 = vmatpush1.bf16.msra.mxu0 %v125
    %197 = vmatprep.subr.bf16.mxu0 0
    %198 = vmatpush1.bf16.msra.mxu0 %v126
    %199 = vmatprep.subr.bf16.mxu0 0
    %200 = vmatpush1.bf16.msra.mxu0 %v127
    %201 = vmatprep.subr.bf16.mxu0 0
    %202 = vmatpush1.bf16.msra.mxu0 %v128
    %203 = vmatprep.subr.bf16.mxu0 0
    %204 = vmatpush1.bf16.msra.mxu0 0
    %205 = vmatprep.subr.bf16.mxu0 0
    %206 = vmatpush1.bf16.msra.mxu0 0
    %207 = vmatprep.subr.bf16.mxu0 0
    %208 = vmatpush1.bf16.msra.mxu0 0
    %209 = vmatprep.subr.bf16.mxu0 0
    %210 = vmatpush1.bf16.msra.mxu0 0
    %211 = vmatprep.subr.bf16.mxu0 0
    %212 = vmatpush1.bf16.msra.mxu0 0
    %213 = vmatprep.subr.bf16.mxu0 0
    %214 = vmatpush1.bf16.msra.mxu0 0
    %215 = vmatprep.subr.bf16.mxu0 0
    %216 = vmatpush1.bf16.msra.mxu0 0
    %217 = vmatprep.subr.bf16.mxu0 0
    %218 = vmatpush1.bf16.msra.mxu0 0
    %219 = vmatprep.mubr.bf16.mxu0 0
    %220 = vmatmul.mubr.bf16.gmra.mrb[0].mxu0 %v185
    %v221 = vpop.f32.mrb[0].mxu0
    %v222 = vadd.f32 %v82, %v221
    %v223 = vpop.f32.mrb[0].mxu0
    %v224 = vpop.f32.mrb[0].mxu0
    %v225 = vadd.f32 %v82, %v224
    %v226 = vpop.f32.mrb[0].mxu0
    %227 = vdwg.mxu0
    %v228 = vmax.f32 %v222, 0.0
    %v229 = vmax.f32 %v225, 0.0
    %v230 = vpack.c.bf16 %v229, %v228
    %s231 = scalar_lea.vmem [#allocation5], 64
    %v232 = vld [vmem:[%s231] sm:$0xf]
    %v233 = vld [vmem:[%s231 + $0x4] sm:$0xf]
    %v234 = vld [vmem:[%s231 + $0x8] sm:$0xf]
    %v235 = vld [vmem:[%s231 + $0xc] sm:$0xf]
    %v236 = vld [vmem:[%s231 + $0x10] sm:$0xf]
    %v237 = vld [vmem:[%s231 + $0x14] sm:$0xf]
    %v238 = vld [vmem:[%s231 + $0x18] sm:$0xf]
    %v239 = vld [vmem:[%s231 + $0x1c] sm:$0xf]
    %v240 = vld [vmem:[%s231 + $0x20] sm:$0xf]
    %v241 = vld [vmem:[%s231 + $0x24] sm:$0xf]
    %v242 = vld [vmem:[%s231 + $0x28] sm:$0xf]
    %v243 = vld [vmem:[%s231 + $0x2c] sm:$0xf]
    %v244 = vld [vmem:[%s231 + $0x30] sm:$0xf]
    %v245 = vld [vmem:[%s231 + $0x34] sm:$0xf]
    %v246 = vld [vmem:[%s231 + $0x38] sm:$0xf]
    %v247 = vld [vmem:[%s231 + $0x3c] sm:$0xf]
    %v248 = vlaneseq
    %v249 = vshrl.u32 %v248, 7
    %v250 = vsub.s32 1, %v249
    %v251 = vrot.slane %v61, %v250
    %v268 = vunpack.c.l.b16 %v232
    %v269 = vunpack.c.l.b16 %v233
    %v270 = vunpack.c.l.b16 %v234
    %v271 = vunpack.c.l.b16 %v235
    %v272 = vunpack.c.l.b16 %v236
    %v273 = vunpack.c.l.b16 %v237
    %v274 = vunpack.c.l.b16 %v238
    %v275 = vunpack.c.l.b16 %v239
    %v276 = vunpack.c.l.b16 %v240
    %v277 = vunpack.c.l.b16 %v241
    %v278 = vunpack.c.l.b16 %v242
    %v279 = vunpack.c.l.b16 %v243
    %v280 = vunpack.c.l.b16 %v244
    %v281 = vunpack.c.l.b16 %v245
    %v282 = vunpack.c.l.b16 %v246
    %v283 = vunpack.c.l.b16 %v247
    %v284 = vpack.c.b16 %v269, %v268
    %v285 = vpack.c.b16 %v271, %v270
    %v286 = vpack.c.b16 %v273, %v272
    %v287 = vpack.c.b16 %v275, %v274
    %v288 = vpack.c.b16 %v277, %v276
    %v289 = vpack.c.b16 %v279, %v278
    %v290 = vpack.c.b16 %v281, %v280
    %v291 = vpack.c.b16 %v283, %v282
    %300 = vmatprep.subr.bf16.mxu0 0
    %301 = vmatpush1.bf16.msra.mxu0 %v284
    %302 = vmatprep.subr.bf16.mxu0 0
    %303 = vmatpush1.bf16.msra.mxu0 %v285
    %304 = vmatprep.subr.bf16.mxu0 0
    %305 = vmatpush1.bf16.msra.mxu0 %v286
    %306 = vmatprep.subr.bf16.mxu0 0
    %307 = vmatpush1.bf16.msra.mxu0 %v287
    %308 = vmatprep.subr.bf16.mxu0 0
    %309 = vmatpush1.bf16.msra.mxu0 %v288
    %310 = vmatprep.subr.bf16.mxu0 0
    %311 = vmatpush1.bf16.msra.mxu0 %v289
    %312 = vmatprep.subr.bf16.mxu0 0
    %313 = vmatpush1.bf16.msra.mxu0 %v290
    %314 = vmatprep.subr.bf16.mxu0 0
    %315 = vmatpush1.bf16.msra.mxu0 %v291
    %316 = vmatprep.subr.bf16.mxu0 0
    %317 = vmatpush1.bf16.msra.mxu0 0
    %318 = vmatprep.subr.bf16.mxu0 0
    %319 = vmatpush1.bf16.msra.mxu0 0
    %320 = vmatprep.subr.bf16.mxu0 0
    %321 = vmatpush1.bf16.msra.mxu0 0
    %322 = vmatprep.subr.bf16.mxu0 0
    %323 = vmatpush1.bf16.msra.mxu0 0
    %324 = vmatprep.subr.bf16.mxu0 0
    %325 = vmatpush1.bf16.msra.mxu0 0
    %326 = vmatprep.subr.bf16.mxu0 0
    %327 = vmatpush1.bf16.msra.mxu0 0
    %328 = vmatprep.subr.bf16.mxu0 0
    %329 = vmatpush1.bf16.msra.mxu0 0
    %330 = vmatprep.subr.bf16.mxu0 0
    %331 = vmatpush1.bf16.msra.mxu0 0
    %332 = vmatprep.mubr.bf16.mxu0 0
    %333 = vmatmul.mubr.bf16.gmra.mrb[0].mxu0 %v180
    %v334 = vpop.f32.mrb[0].mxu0
    %v335 = vadd.f32 %v251, %v334
    %v336 = vpop.f32.mrb[0].mxu0
    %v337 = vpop.f32.mrb[0].mxu0
    %v338 = vadd.f32 %v251, %v337
    %v339 = vpop.f32.mrb[0].mxu0
    %340 = vdwg.mxu0
    %v341 = vmax.f32 %v335, 0.0
    %v342 = vmax.f32 %v338, 0.0
    %v343 = vpack.c.bf16 %v342, %v341
    %344 = vmatprep.subr.bf16.mxu0 0
    %345 = vmatpush1.bf16.msra.mxu0 %v284
    %346 = vmatprep.subr.bf16.mxu0 0
    %347 = vmatpush1.bf16.msra.mxu0 %v285
    %348 = vmatprep.subr.bf16.mxu0 0
    %349 = vmatpush1.bf16.msra.mxu0 %v286
    %350 = vmatprep.subr.bf16.mxu0 0
    %351 = vmatpush1.bf16.msra.mxu0 %v287
    %352 = vmatprep.subr.bf16.mxu0 0
    %353 = vmatpush1.bf16.msra.mxu0 %v288
    %354 = vmatprep.subr.bf16.mxu0 0
    %355 = vmatpush1.bf16.msra.mxu0 %v289
    %356 = vmatprep.subr.bf16.mxu0 0
    %357 = vmatpush1.bf16.msra.mxu0 %v290
    %358 = vmatprep.subr.bf16.mxu0 0
    %359 = vmatpush1.bf16.msra.mxu0 %v291
    %360 = vmatprep.subr.bf16.mxu0 0
    %361 = vmatpush1.bf16.msra.mxu0 0
    %362 = vmatprep.subr.bf16.mxu0 0
    %363 = vmatpush1.bf16.msra.mxu0 0
    %364 = vmatprep.subr.bf16.mxu0 0
    %365 = vmatpush1.bf16.msra.mxu0 0
    %366 = vmatprep.subr.bf16.mxu0 0
    %367 = vmatpush1.bf16.msra.mxu0 0
    %368 = vmatprep.subr.bf16.mxu0 0
    %369 = vmatpush1.bf16.msra.mxu0 0
    %370 = vmatprep.subr.bf16.mxu0 0
    %371 = vmatpush1.bf16.msra.mxu0 0
    %372 = vmatprep.subr.bf16.mxu0 0
    %373 = vmatpush1.bf16.msra.mxu0 0
    %374 = vmatprep.subr.bf16.mxu0 0
    %375 = vmatpush1.bf16.msra.mxu0 0
    %376 = vmatprep.mubr.bf16.mxu0 0
    %377 = vmatmul.mubr.bf16.gmra.mrb[0].mxu0 %v230
    %v378 = vpop.f32.mrb[0].mxu0
    %v379 = vadd.f32 %v251, %v378
    %v380 = vpop.f32.mrb[0].mxu0
    %v381 = vpop.f32.mrb[0].mxu0
    %v382 = vadd.f32 %v251, %v381
    %v383 = vpop.f32.mrb[0].mxu0
    %384 = vdwg.mxu0
    %v385 = vmax.f32 %v379, 0.0
    %v386 = vmax.f32 %v382, 0.0
    %v387 = vpack.c.bf16 %v386, %v385
    %s388 = scalar_lea.vmem [#allocation5], 128
    %v389 = vld [vmem:[%s388] sm:$0xf]
    %v390 = vld [vmem:[%s388 + $0x4] sm:$0xf]
    %v391 = vld [vmem:[%s388 + $0x8] sm:$0xf]
    %v392 = vld [vmem:[%s388 + $0xc] sm:$0xf]
    %v393 = vld [vmem:[%s388 + $0x10] sm:$0xf]
    %v394 = vld [vmem:[%s388 + $0x14] sm:$0xf]
    %v395 = vld [vmem:[%s388 + $0x18] sm:$0xf]
    %v396 = vld [vmem:[%s388 + $0x1c] sm:$0xf]
    %v397 = vld [vmem:[%s388 + $0x20] sm:$0xf]
    %v398 = vld [vmem:[%s388 + $0x24] sm:$0xf]
    %v399 = vld [vmem:[%s388 + $0x28] sm:$0xf]
    %v400 = vld [vmem:[%s388 + $0x2c] sm:$0xf]
    %v401 = vld [vmem:[%s388 + $0x30] sm:$0xf]
    %v402 = vld [vmem:[%s388 + $0x34] sm:$0xf]
    %v403 = vld [vmem:[%s388 + $0x38] sm:$0xf]
    %v404 = vld [vmem:[%s388 + $0x3c] sm:$0xf]
    %v405 = vlaneseq
    %v406 = vshrl.u32 %v405, 7
    %v407 = vsub.s32 2, %v406
    %v408 = vrot.slane %v61, %v407
    %v425 = vunpack.c.l.b16 %v389
    %v426 = vunpack.c.l.b16 %v390
    %v427 = vunpack.c.l.b16 %v391
    %v428 = vunpack.c.l.b16 %v392
    %v429 = vunpack.c.l.b16 %v393
    %v430 = vunpack.c.l.b16 %v394
    %v431 = vunpack.c.l.b16 %v395
    %v432 = vunpack.c.l.b16 %v396
    %v433 = vunpack.c.l.b16 %v397
    %v434 = vunpack.c.l.b16 %v398
    %v435 = vunpack.c.l.b16 %v399
    %v436 = vunpack.c.l.b16 %v400
    %v437 = vunpack.c.l.b16 %v401
    %v438 = vunpack.c.l.b16 %v402
    %v439 = vunpack.c.l.b16 %v403
    %v440 = vunpack.c.l.b16 %v404
    %v441 = vpack.c.b16 %v426, %v425
    %v442 = vpack.c.b16 %v428, %v427
    %v443 = vpack.c.b16 %v430, %v429
    %v444 = vpack.c.b16 %v432, %v431
    %v445 = vpack.c.b16 %v434, %v433
    %v446 = vpack.c.b16 %v436, %v435
    %v447 = vpack.c.b16 %v438, %v437
    %v448 = vpack.c.b16 %v440, %v439
    %457 = vmatprep.subr.bf16.mxu0 0
    %458 = vmatpush1.bf16.msra.mxu0 %v441
    %459 = vmatprep.subr.bf16.mxu0 0
    %460 = vmatpush1.bf16.msra.mxu0 %v442
    %461 = vmatprep.subr.bf16.mxu0 0
    %462 = vmatpush1.bf16.msra.mxu0 %v443
    %463 = vmatprep.subr.bf16.mxu0 0
    %464 = vmatpush1.bf16.msra.mxu0 %v444
    %465 = vmatprep.subr.bf16.mxu0 0
    %466 = vmatpush1.bf16.msra.mxu0 %v445
    %467 = vmatprep.subr.bf16.mxu0 0
    %468 = vmatpush1.bf16.msra.mxu0 %v446
    %469 = vmatprep.subr.bf16.mxu0 0
    %470 = vmatpush1.bf16.msra.mxu0 %v447
    %471 = vmatprep.subr.bf16.mxu0 0
    %472 = vmatpush1.bf16.msra.mxu0 %v448
    %473 = vmatprep.subr.bf16.mxu0 0
    %474 = vmatpush1.bf16.msra.mxu0 0
    %475 = vmatprep.subr.bf16.mxu0 0
    %476 = vmatpush1.bf16.msra.mxu0 0
    %477 = vmatprep.subr.bf16.mxu0 0
    %478 = vmatpush1.bf16.msra.mxu0 0
    %479 = vmatprep.subr.bf16.mxu0 0
    %480 = vmatpush1.bf16.msra.mxu0 0
    %481 = vmatprep.subr.bf16.mxu0 0
    %482 = vmatpush1.bf16.msra.mxu0 0
    %483 = vmatprep.subr.bf16.mxu0 0
    %484 = vmatpush1.bf16.msra.mxu0 0
    %485 = vmatprep.subr.bf16.mxu0 0
    %486 = vmatpush1.bf16.msra.mxu0 0
    %487 = vmatprep.subr.bf16.mxu0 0
    %488 = vmatpush1.bf16.msra.mxu0 0
    %489 = vmatprep.mubr.bf16.mxu0 0
    %490 = vmatmul.mubr.bf16.gmra.mrb[0].mxu0 %v343
    %v491 = vpop.f32.mrb[0].mxu0
    %v492 = vadd.f32 %v408, %v491
    %v493 = vpop.f32.mrb[0].mxu0
    %v494 = vpop.f32.mrb[0].mxu0
    %v495 = vadd.f32 %v408, %v494
    %v496 = vpop.f32.mrb[0].mxu0
    %497 = vdwg.mxu0
    %v498 = vmax.f32 %v492, 0.0
    %v499 = vmax.f32 %v495, 0.0
    %v500 = vpack.c.bf16 %v499, %v498
    %501 = vmatprep.subr.bf16.mxu0 0
    %502 = vmatpush1.bf16.msra.mxu0 %v441
    %503 = vmatprep.subr.bf16.mxu0 0
    %504 = vmatpush1.bf16.msra.mxu0 %v442
    %505 = vmatprep.subr.bf16.mxu0 0
    %506 = vmatpush1.bf16.msra.mxu0 %v443
    %507 = vmatprep.subr.bf16.mxu0 0
    %508 = vmatpush1.bf16.msra.mxu0 %v444
    %509 = vmatprep.subr.bf16.mxu0 0
    %510 = vmatpush1.bf16.msra.mxu0 %v445
    %511 = vmatprep.subr.bf16.mxu0 0
    %512 = vmatpush1.bf16.msra.mxu0 %v446
    %513 = vmatprep.subr.bf16.mxu0 0
    %514 = vmatpush1.bf16.msra.mxu0 %v447
    %515 = vmatprep.subr.bf16.mxu0 0
    %516 = vmatpush1.bf16.msra.mxu0 %v448
    %517 = vmatprep.subr.bf16.mxu0 0
    %518 = vmatpush1.bf16.msra.mxu0 0
    %519 = vmatprep.subr.bf16.mxu0 0
    %520 = vmatpush1.bf16.msra.mxu0 0
    %521 = vmatprep.subr.bf16.mxu0 0
    %522 = vmatpush1.bf16.msra.mxu0 0
    %523 = vmatprep.subr.bf16.mxu0 0
    %524 = vmatpush1.bf16.msra.mxu0 0
    %525 = vmatprep.subr.bf16.mxu0 0
    %526 = vmatpush1.bf16.msra.mxu0 0
    %527 = vmatprep.subr.bf16.mxu0 0
    %528 = vmatpush1.bf16.msra.mxu0 0
    %529 = vmatprep.subr.bf16.mxu0 0
    %530 = vmatpush1.bf16.msra.mxu0 0
    %531 = vmatprep.subr.bf16.mxu0 0
    %532 = vmatpush1.bf16.msra.mxu0 0
    %533 = vmatprep.mubr.bf16.mxu0 0
    %534 = vmatmul.mubr.bf16.gmra.mrb[0].mxu0 %v387
    %v535 = vpop.f32.mrb[0].mxu0
    %v536 = vadd.f32 %v408, %v535
    %v537 = vpop.f32.mrb[0].mxu0
    %v538 = vpop.f32.mrb[0].mxu0
    %v539 = vadd.f32 %v408, %v538
    %v540 = vpop.f32.mrb[0].mxu0
    %541 = vdwg.mxu0
    %v542 = vmax.f32 %v536, 0.0
    %v543 = vmax.f32 %v539, 0.0
    %v544 = vpack.c.bf16 %v543, %v542
    %s545 = scalar_lea.vmem [#allocation5], 192
    %v546 = vld [vmem:[%s545] sm:$0xf]
    %v547 = vld [vmem:[%s545 + $0x4] sm:$0xf]
    %v548 = vld [vmem:[%s545 + $0x8] sm:$0xf]
    %v549 = vld [vmem:[%s545 + $0xc] sm:$0xf]
    %v550 = vld [vmem:[%s545 + $0x10] sm:$0xf]
    %v551 = vld [vmem:[%s545 + $0x14] sm:$0xf]
    %v552 = vld [vmem:[%s545 + $0x18] sm:$0xf]
    %v553 = vld [vmem:[%s545 + $0x1c] sm:$0xf]
    %v554 = vld [vmem:[%s545 + $0x20] sm:$0xf]
    %v555 = vld [vmem:[%s545 + $0x24] sm:$0xf]
    %v556 = vld [vmem:[%s545 + $0x28] sm:$0xf]
    %v557 = vld [vmem:[%s545 + $0x2c] sm:$0xf]
    %v558 = vld [vmem:[%s545 + $0x30] sm:$0xf]
    %v559 = vld [vmem:[%s545 + $0x34] sm:$0xf]
    %v560 = vld [vmem:[%s545 + $0x38] sm:$0xf]
    %v561 = vld [vmem:[%s545 + $0x3c] sm:$0xf]
    %v562 = vlaneseq
    %v563 = vshrl.u32 %v562, 7
    %v564 = vsub.s32 3, %v563
    %v565 = vrot.slane %v61, %v564
    %v582 = vunpack.c.l.b16 %v546
    %v583 = vunpack.c.l.b16 %v547
    %v584 = vunpack.c.l.b16 %v548
    %v585 = vunpack.c.l.b16 %v549
    %v586 = vunpack.c.l.b16 %v550
    %v587 = vunpack.c.l.b16 %v551
    %v588 = vunpack.c.l.b16 %v552
    %v589 = vunpack.c.l.b16 %v553
    %v590 = vunpack.c.l.b16 %v554
    %v591 = vunpack.c.l.b16 %v555
    %v592 = vunpack.c.l.b16 %v556
    %v593 = vunpack.c.l.b16 %v557
    %v594 = vunpack.c.l.b16 %v558
    %v595 = vunpack.c.l.b16 %v559
    %v596 = vunpack.c.l.b16 %v560
    %v597 = vunpack.c.l.b16 %v561
    %v598 = vpack.c.b16 %v583, %v582
    %v599 = vpack.c.b16 %v585, %v584
    %v600 = vpack.c.b16 %v587, %v586
    %v601 = vpack.c.b16 %v589, %v588
    %v602 = vpack.c.b16 %v591, %v590
    %v603 = vpack.c.b16 %v593, %v592
    %v604 = vpack.c.b16 %v595, %v594
    %v605 = vpack.c.b16 %v597, %v596
    %614 = vmatprep.subr.bf16.mxu0 0
    %615 = vmatpush1.bf16.msra.mxu0 %v598
    %616 = vmatprep.subr.bf16.mxu0 0
    %617 = vmatpush1.bf16.msra.mxu0 %v599
    %618 = vmatprep.subr.bf16.mxu0 0
    %619 = vmatpush1.bf16.msra.mxu0 %v600
    %620 = vmatprep.subr.bf16.mxu0 0
    %621 = vmatpush1.bf16.msra.mxu0 %v601
    %622 = vmatprep.subr.bf16.mxu0 0
    %623 = vmatpush1.bf16.msra.mxu0 %v602
    %624 = vmatprep.subr.bf16.mxu0 0
    %625 = vmatpush1.bf16.msra.mxu0 %v603
    %626 = vmatprep.subr.bf16.mxu0 0
    %627 = vmatpush1.bf16.msra.mxu0 %v604
    %628 = vmatprep.subr.bf16.mxu0 0
    %629 = vmatpush1.bf16.msra.mxu0 %v605
    %630 = vmatprep.subr.bf16.mxu0 0
    %631 = vmatpush1.bf16.msra.mxu0 0
    %632 = vmatprep.subr.bf16.mxu0 0
    %633 = vmatpush1.bf16.msra.mxu0 0
    %634 = vmatprep.subr.bf16.mxu0 0
    %635 = vmatpush1.bf16.msra.mxu0 0
    %636 = vmatprep.subr.bf16.mxu0 0
    %637 = vmatpush1.bf16.msra.mxu0 0
    %638 = vmatprep.subr.bf16.mxu0 0
    %639 = vmatpush1.bf16.msra.mxu0 0
    %640 = vmatprep.subr.bf16.mxu0 0
    %641 = vmatpush1.bf16.msra.mxu0 0
    %642 = vmatprep.subr.bf16.mxu0 0
    %643 = vmatpush1.bf16.msra.mxu0 0
    %644 = vmatprep.subr.bf16.mxu0 0
    %645 = vmatpush1.bf16.msra.mxu0 0
    %646 = vmatprep.mubr.bf16.mxu0 0
    %647 = vmatmul.mubr.bf16.gmra.mrb[0].mxu0 %v500
    %v648 = vpop.f32.mrb[0].mxu0
    %v649 = vadd.f32 %v565, %v648
    %v650 = vpop.f32.mrb[0].mxu0
    %v651 = vpop.f32.mrb[0].mxu0
    %v652 = vadd.f32 %v565, %v651
    %v653 = vpop.f32.mrb[0].mxu0
    %654 = vdwg.mxu0
    %v655 = vmax.f32 %v649, 0.0
    %v656 = vmax.f32 %v652, 0.0
    %v657 = vpack.c.bf16 %v656, %v655
    %658 = vmatprep.subr.bf16.mxu0 0
    %659 = vmatpush1.bf16.msra.mxu0 %v598
    %660 = vmatprep.subr.bf16.mxu0 0
    %661 = vmatpush1.bf16.msra.mxu0 %v599
    %662 = vmatprep.subr.bf16.mxu0 0
    %663 = vmatpush1.bf16.msra.mxu0 %v600
    %664 = vmatprep.subr.bf16.mxu0 0
    %665 = vmatpush1.bf16.msra.mxu0 %v601
    %666 = vmatprep.subr.bf16.mxu0 0
    %667 = vmatpush1.bf16.msra.mxu0 %v602
    %668 = vmatprep.subr.bf16.mxu0 0
    %669 = vmatpush1.bf16.msra.mxu0 %v603
    %670 = vmatprep.subr.bf16.mxu0 0
    %671 = vmatpush1.bf16.msra.mxu0 %v604
    %672 = vmatprep.subr.bf16.mxu0 0
    %673 = vmatpush1.bf16.msra.mxu0 %v605
    %674 = vmatprep.subr.bf16.mxu0 0
    %675 = vmatpush1.bf16.msra.mxu0 0
    %676 = vmatprep.subr.bf16.mxu0 0
    %677 = vmatpush1.bf16.msra.mxu0 0
    %678 = vmatprep.subr.bf16.mxu0 0
    %679 = vmatpush1.bf16.msra.mxu0 0
    %680 = vmatprep.subr.bf16.mxu0 0
    %681 = vmatpush1.bf16.msra.mxu0 0
    %682 = vmatprep.subr.bf16.mxu0 0
    %683 = vmatpush1.bf16.msra.mxu0 0
    %684 = vmatprep.subr.bf16.mxu0 0
    %685 = vmatpush1.bf16.msra.mxu0 0
    %686 = vmatprep.subr.bf16.mxu0 0
    %687 = vmatpush1.bf16.msra.mxu0 0
    %688 = vmatprep.subr.bf16.mxu0 0
    %689 = vmatpush1.bf16.msra.mxu0 0
    %690 = vmatprep.mubr.bf16.mxu0 0
    %691 = vmatmul.mubr.bf16.gmra.mrb[0].mxu0 %v544
    %v692 = vpop.f32.mrb[0].mxu0
    %v693 = vadd.f32 %v565, %v692
    %v694 = vpop.f32.mrb[0].mxu0
    %v695 = vpop.f32.mrb[0].mxu0
    %v696 = vadd.f32 %v565, %v695
    %v697 = vpop.f32.mrb[0].mxu0
    %698 = vdwg.mxu0
    %v699 = vmax.f32 %v693, 0.0
    %v700 = vmax.f32 %v696, 0.0
    %v701 = vpack.c.bf16 %v700, %v699
    %s702 = scalar_lea.vmem [#allocation5], 256
    %v703 = vld [vmem:[%s702] sm:$0xf]
    %v704 = vld [vmem:[%s702 + $0x4] sm:$0xf]
    %v705 = vld [vmem:[%s702 + $0x8] sm:$0xf]
    %v706 = vld [vmem:[%s702 + $0xc] sm:$0xf]
    %v707 = vld [vmem:[%s702 + $0x10] sm:$0xf]
    %v708 = vld [vmem:[%s702 + $0x14] sm:$0xf]
    %v709 = vld [vmem:[%s702 + $0x18] sm:$0xf]
    %v710 = vld [vmem:[%s702 + $0x1c] sm:$0xf]
    %v711 = vld [vmem:[%s702 + $0x20] sm:$0xf]
    %v712 = vld [vmem:[%s702 + $0x24] sm:$0xf]
    %v713 = vld [vmem:[%s702 + $0x28] sm:$0xf]
    %v714 = vld [vmem:[%s702 + $0x2c] sm:$0xf]
    %v715 = vld [vmem:[%s702 + $0x30] sm:$0xf]
    %v716 = vld [vmem:[%s702 + $0x34] sm:$0xf]
    %v717 = vld [vmem:[%s702 + $0x38] sm:$0xf]
    %v718 = vld [vmem:[%s702 + $0x3c] sm:$0xf]
    %v719 = vlaneseq
    %v720 = vshrl.u32 %v719, 7
    %v721 = vsub.s32 4, %v720
    %v722 = vrot.slane %v61, %v721
    %v739 = vunpack.c.l.b16 %v703
    %v740 = vunpack.c.l.b16 %v704
    %v741 = vunpack.c.l.b16 %v705
    %v742 = vunpack.c.l.b16 %v706
    %v743 = vunpack.c.l.b16 %v707
    %v744 = vunpack.c.l.b16 %v708
    %v745 = vunpack.c.l.b16 %v709
    %v746 = vunpack.c.l.b16 %v710
    %v747 = vunpack.c.l.b16 %v711
    %v748 = vunpack.c.l.b16 %v712
    %v749 = vunpack.c.l.b16 %v713
    %v750 = vunpack.c.l.b16 %v714
    %v751 = vunpack.c.l.b16 %v715
    %v752 = vunpack.c.l.b16 %v716
    %v753 = vunpack.c.l.b16 %v717
    %v754 = vunpack.c.l.b16 %v718
    %v755 = vpack.c.b16 %v740, %v739
    %v756 = vpack.c.b16 %v742, %v741
    %v757 = vpack.c.b16 %v744, %v743
    %v758 = vpack.c.b16 %v746, %v745
    %v759 = vpack.c.b16 %v748, %v747
    %v760 = vpack.c.b16 %v750, %v749
    %v761 = vpack.c.b16 %v752, %v751
    %v762 = vpack.c.b16 %v754, %v753
    %771 = vmatprep.subr.bf16.mxu0 0
    %772 = vmatpush1.bf16.msra.mxu0 %v755
    %773 = vmatprep.subr.bf16.mxu0 0
    %774 = vmatpush1.bf16.msra.mxu0 %v756
    %775 = vmatprep.subr.bf16.mxu0 0
    %776 = vmatpush1.bf16.msra.mxu0 %v757
    %777 = vmatprep.subr.bf16.mxu0 0
    %778 = vmatpush1.bf16.msra.mxu0 %v758
    %779 = vmatprep.subr.bf16.mxu0 0
    %780 = vmatpush1.bf16.msra.mxu0 %v759
    %781 = vmatprep.subr.bf16.mxu0 0
    %782 = vmatpush1.bf16.msra.mxu0 %v760
    %783 = vmatprep.subr.bf16.mxu0 0
    %784 = vmatpush1.bf16.msra.mxu0 %v761
    %785 = vmatprep.subr.bf16.mxu0 0
    %786 = vmatpush1.bf16.msra.mxu0 %v762
    %787 = vmatprep.subr.bf16.mxu0 0
    %788 = vmatpush1.bf16.msra.mxu0 0
    %789 = vmatprep.subr.bf16.mxu0 0
    %790 = vmatpush1.bf16.msra.mxu0 0
    %791 = vmatprep.subr.bf16.mxu0 0
    %792 = vmatpush1.bf16.msra.mxu0 0
    %793 = vmatprep.subr.bf16.mxu0 0
    %794 = vmatpush1.bf16.msra.mxu0 0
    %795 = vmatprep.subr.bf16.mxu0 0
    %796 = vmatpush1.bf16.msra.mxu0 0
    %797 = vmatprep.subr.bf16.mxu0 0
    %798 = vmatpush1.bf16.msra.mxu0 0
    %799 = vmatprep.subr.bf16.mxu0 0
    %800 = vmatpush1.bf16.msra.mxu0 0
    %801 = vmatprep.subr.bf16.mxu0 0
    %802 = vmatpush1.bf16.msra.mxu0 0
    %803 = vmatprep.mubr.bf16.mxu0 0
    %804 = vmatmul.mubr.bf16.gmra.mrb[0].mxu0 %v657
    %v805 = vpop.f32.mrb[0].mxu0
    %v806 = vadd.f32 %v722, %v805
    %v807 = vpop.f32.mrb[0].mxu0
    %v808 = vpop.f32.mrb[0].mxu0
    %v809 = vadd.f32 %v722, %v808
    %v810 = vpop.f32.mrb[0].mxu0
    %811 = vdwg.mxu0
    %v812 = vmax.f32 %v806, 0.0
    %v813 = vmax.f32 %v809, 0.0
    %v814 = vpack.c.bf16 %v813, %v812
    %815 = vmatprep.subr.bf16.mxu0 0
    %816 = vmatpush1.bf16.msra.mxu0 %v755
    %817 = vmatprep.subr.bf16.mxu0 0
    %818 = vmatpush1.bf16.msra.mxu0 %v756
    %819 = vmatprep.subr.bf16.mxu0 0
    %820 = vmatpush1.bf16.msra.mxu0 %v757
    %821 = vmatprep.subr.bf16.mxu0 0
    %822 = vmatpush1.bf16.msra.mxu0 %v758
    %823 = vmatprep.subr.bf16.mxu0 0
    %824 = vmatpush1.bf16.msra.mxu0 %v759
    %825 = vmatprep.subr.bf16.mxu0 0
    %826 = vmatpush1.bf16.msra.mxu0 %v760
    %827 = vmatprep.subr.bf16.mxu0 0
    %828 = vmatpush1.bf16.msra.mxu0 %v761
    %829 = vmatprep.subr.bf16.mxu0 0
    %830 = vmatpush1.bf16.msra.mxu0 %v762
    %831 = vmatprep.subr.bf16.mxu0 0
    %832 = vmatpush1.bf16.msra.mxu0 0
    %833 = vmatprep.subr.bf16.mxu0 0
    %834 = vmatpush1.bf16.msra.mxu0 0
    %835 = vmatprep.subr.bf16.mxu0 0
    %836 = vmatpush1.bf16.msra.mxu0 0
    %837 = vmatprep.subr.bf16.mxu0 0
    %838 = vmatpush1.bf16.msra.mxu0 0
    %839 = vmatprep.subr.bf16.mxu0 0
    %840 = vmatpush1.bf16.msra.mxu0 0
    %841 = vmatprep.subr.bf16.mxu0 0
    %842 = vmatpush1.bf16.msra.mxu0 0
    %843 = vmatprep.subr.bf16.mxu0 0
    %844 = vmatpush1.bf16.msra.mxu0 0
    %845 = vmatprep.subr.bf16.mxu0 0
    %846 = vmatpush1.bf16.msra.mxu0 0
    %847 = vmatprep.mubr.bf16.mxu0 0
    %848 = vmatmul.mubr.bf16.gmra.mrb[0].mxu0 %v701
    %v849 = vpop.f32.mrb[0].mxu0
    %v850 = vadd.f32 %v722, %v849
    %v851 = vpop.f32.mrb[0].mxu0
    %v852 = vpop.f32.mrb[0].mxu0
    %v853 = vadd.f32 %v722, %v852
    %v854 = vpop.f32.mrb[0].mxu0
    %855 = vdwg.mxu0
    %v856 = vmax.f32 %v850, 0.0
    %v857 = vmax.f32 %v853, 0.0
    %v858 = vpack.c.bf16 %v857, %v856
    %s859 = scalar_lea.vmem [#allocation5], 320
    %v860 = vld [vmem:[%s859] sm:$0xf]
    %v861 = vld [vmem:[%s859 + $0x4] sm:$0xf]
    %v862 = vld [vmem:[%s859 + $0x8] sm:$0xf]
    %v863 = vld [vmem:[%s859 + $0xc] sm:$0xf]
    %v864 = vld [vmem:[%s859 + $0x10] sm:$0xf]
    %v865 = vld [vmem:[%s859 + $0x14] sm:$0xf]
    %v866 = vld [vmem:[%s859 + $0x18] sm:$0xf]
    %v867 = vld [vmem:[%s859 + $0x1c] sm:$0xf]
    %v868 = vld [vmem:[%s859 + $0x20] sm:$0xf]
    %v869 = vld [vmem:[%s859 + $0x24] sm:$0xf]
    %v870 = vld [vmem:[%s859 + $0x28] sm:$0xf]
    %v871 = vld [vmem:[%s859 + $0x2c] sm:$0xf]
    %v872 = vld [vmem:[%s859 + $0x30] sm:$0xf]
    %v873 = vld [vmem:[%s859 + $0x34] sm:$0xf]
    %v874 = vld [vmem:[%s859 + $0x38] sm:$0xf]
    %v875 = vld [vmem:[%s859 + $0x3c] sm:$0xf]
    %v876 = vlaneseq
    %v877 = vshrl.u32 %v876, 7
    %v878 = vsub.s32 5, %v877
    %v879 = vrot.slane %v61, %v878
    %v896 = vunpack.c.l.b16 %v860
    %v897 = vunpack.c.l.b16 %v861
    %v898 = vunpack.c.l.b16 %v862
    %v899 = vunpack.c.l.b16 %v863
    %v900 = vunpack.c.l.b16 %v864
    %v901 = vunpack.c.l.b16 %v865
    %v902 = vunpack.c.l.b16 %v866
    %v903 = vunpack.c.l.b16 %v867
    %v904 = vunpack.c.l.b16 %v868
    %v905 = vunpack.c.l.b16 %v869
    %v906 = vunpack.c.l.b16 %v870
    %v907 = vunpack.c.l.b16 %v871
    %v908 = vunpack.c.l.b16 %v872
    %v909 = vunpack.c.l.b16 %v873
    %v910 = vunpack.c.l.b16 %v874
    %v911 = vunpack.c.l.b16 %v875
    %v912 = vpack.c.b16 %v897, %v896
    %v913 = vpack.c.b16 %v899, %v898
    %v914 = vpack.c.b16 %v901, %v900
    %v915 = vpack.c.b16 %v903, %v902
    %v916 = vpack.c.b16 %v905, %v904
    %v917 = vpack.c.b16 %v907, %v906
    %v918 = vpack.c.b16 %v909, %v908
    %v919 = vpack.c.b16 %v911, %v910
    %928 = vmatprep.subr.bf16.mxu0 0
    %929 = vmatpush1.bf16.msra.mxu0 %v912
    %930 = vmatprep.subr.bf16.mxu0 0
    %931 = vmatpush1.bf16.msra.mxu0 %v913
    %932 = vmatprep.subr.bf16.mxu0 0
    %933 = vmatpush1.bf16.msra.mxu0 %v914
    %934 = vmatprep.subr.bf16.mxu0 0
    %935 = vmatpush1.bf16.msra.mxu0 %v915
    %936 = vmatprep.subr.bf16.mxu0 0
    %937 = vmatpush1.bf16.msra.mxu0 %v916
    %938 = vmatprep.subr.bf16.mxu0 0
    %939 = vmatpush1.bf16.msra.mxu0 %v917
    %940 = vmatprep.subr.bf16.mxu0 0
    %941 = vmatpush1.bf16.msra.mxu0 %v918
    %942 = vmatprep.subr.bf16.mxu0 0
    %943 = vmatpush1.bf16.msra.mxu0 %v919
    %944 = vmatprep.subr.bf16.mxu0 0
    %945 = vmatpush1.bf16.msra.mxu0 0
    %946 = vmatprep.subr.bf16.mxu0 0
    %947 = vmatpush1.bf16.msra.mxu0 0
    %948 = vmatprep.subr.bf16.mxu0 0
    %949 = vmatpush1.bf16.msra.mxu0 0
    %950 = vmatprep.subr.bf16.mxu0 0
    %951 = vmatpush1.bf16.msra.mxu0 0
    %952 = vmatprep.subr.bf16.mxu0 0
    %953 = vmatpush1.bf16.msra.mxu0 0
    %954 = vmatprep.subr.bf16.mxu0 0
    %955 = vmatpush1.bf16.msra.mxu0 0
    %956 = vmatprep.subr.bf16.mxu0 0
    %957 = vmatpush1.bf16.msra.mxu0 0
    %958 = vmatprep.subr.bf16.mxu0 0
    %959 = vmatpush1.bf16.msra.mxu0 0
    %960 = vmatprep.mubr.bf16.mxu0 0
    %961 = vmatmul.mubr.bf16.gmra.mrb[0].mxu0 %v814
    %v962 = vpop.f32.mrb[0].mxu0
    %v963 = vadd.f32 %v879, %v962
    %v964 = vpop.f32.mrb[0].mxu0
    %v965 = vpop.f32.mrb[0].mxu0
    %v966 = vadd.f32 %v879, %v965
    %v967 = vpop.f32.mrb[0].mxu0
    %968 = vdwg.mxu0
    %v969 = vmax.f32 %v963, 0.0
    %v970 = vmax.f32 %v966, 0.0
    %v971 = vpack.c.bf16 %v970, %v969
    %972 = vmatprep.subr.bf16.mxu0 0
    %973 = vmatpush1.bf16.msra.mxu0 %v912
    %974 = vmatprep.subr.bf16.mxu0 0
    %975 = vmatpush1.bf16.msra.mxu0 %v913
    %976 = vmatprep.subr.bf16.mxu0 0
    %977 = vmatpush1.bf16.msra.mxu0 %v914
    %978 = vmatprep.subr.bf16.mxu0 0
    %979 = vmatpush1.bf16.msra.mxu0 %v915
    %980 = vmatprep.subr.bf16.mxu0 0
    %981 = vmatpush1.bf16.msra.mxu0 %v916
    %982 = vmatprep.subr.bf16.mxu0 0
    %983 = vmatpush1.bf16.msra.mxu0 %v917
    %984 = vmatprep.subr.bf16.mxu0 0
    %985 = vmatpush1.bf16.msra.mxu0 %v918
    %986 = vmatprep.subr.bf16.mxu0 0
    %987 = vmatpush1.bf16.msra.mxu0 %v919
    %988 = vmatprep.subr.bf16.mxu0 0
    %989 = vmatpush1.bf16.msra.mxu0 0
    %990 = vmatprep.subr.bf16.mxu0 0
    %991 = vmatpush1.bf16.msra.mxu0 0
    %992 = vmatprep.subr.bf16.mxu0 0
    %993 = vmatpush1.bf16.msra.mxu0 0
    %994 = vmatprep.subr.bf16.mxu0 0
    %995 = vmatpush1.bf16.msra.mxu0 0
    %996 = vmatprep.subr.bf16.mxu0 0
    %997 = vmatpush1.bf16.msra.mxu0 0
    %998 = vmatprep.subr.bf16.mxu0 0
    %999 = vmatpush1.bf16.msra.mxu0 0
    %1000 = vmatprep.subr.bf16.mxu0 0
    %1001 = vmatpush1.bf16.msra.mxu0 0
    %1002 = vmatprep.subr.bf16.mxu0 0
    %1003 = vmatpush1.bf16.msra.mxu0 0
    %1004 = vmatprep.mubr.bf16.mxu0 0
    %1005 = vmatmul.mubr.bf16.gmra.mrb[0].mxu0 %v858
    %v1006 = vpop.f32.mrb[0].mxu0
    %v1007 = vadd.f32 %v879, %v1006
    %v1008 = vpop.f32.mrb[0].mxu0
    %v1009 = vpop.f32.mrb[0].mxu0
    %v1010 = vadd.f32 %v879, %v1009
    %v1011 = vpop.f32.mrb[0].mxu0
    %1012 = vdwg.mxu0
    %v1013 = vmax.f32 %v1007, 0.0
    %v1014 = vmax.f32 %v1010, 0.0
    %v1015 = vpack.c.bf16 %v1014, %v1013
    %s1016 = scalar_lea.vmem [#allocation5], 384
    %v1017 = vld [vmem:[%s1016] sm:$0xf]
    %v1018 = vld [vmem:[%s1016 + $0x4] sm:$0xf]
    %v1019 = vld [vmem:[%s1016 + $0x8] sm:$0xf]
    %v1020 = vld [vmem:[%s1016 + $0xc] sm:$0xf]
    %v1021 = vld [vmem:[%s1016 + $0x10] sm:$0xf]
    %v1022 = vld [vmem:[%s1016 + $0x14] sm:$0xf]
    %v1023 = vld [vmem:[%s1016 + $0x18] sm:$0xf]
    %v1024 = vld [vmem:[%s1016 + $0x1c] sm:$0xf]
    %v1025 = vld [vmem:[%s1016 + $0x20] sm:$0xf]
    %v1026 = vld [vmem:[%s1016 + $0x24] sm:$0xf]
    %v1027 = vld [vmem:[%s1016 + $0x28] sm:$0xf]
    %v1028 = vld [vmem:[%s1016 + $0x2c] sm:$0xf]
    %v1029 = vld [vmem:[%s1016 + $0x30] sm:$0xf]
    %v1030 = vld [vmem:[%s1016 + $0x34] sm:$0xf]
    %v1031 = vld [vmem:[%s1016 + $0x38] sm:$0xf]
    %v1032 = vld [vmem:[%s1016 + $0x3c] sm:$0xf]
    %v1033 = vlaneseq
    %v1034 = vshrl.u32 %v1033, 7
    %v1035 = vsub.s32 6, %v1034
    %v1036 = vrot.slane %v61, %v1035
    %v1053 = vunpack.c.l.b16 %v1017
    %v1054 = vunpack.c.l.b16 %v1018
    %v1055 = vunpack.c.l.b16 %v1019
    %v1056 = vunpack.c.l.b16 %v1020
    %v1057 = vunpack.c.l.b16 %v1021
    %v1058 = vunpack.c.l.b16 %v1022
    %v1059 = vunpack.c.l.b16 %v1023
    %v1060 = vunpack.c.l.b16 %v1024
    %v1061 = vunpack.c.l.b16 %v1025
    %v1062 = vunpack.c.l.b16 %v1026
    %v1063 = vunpack.c.l.b16 %v1027
    %v1064 = vunpack.c.l.b16 %v1028
    %v1065 = vunpack.c.l.b16 %v1029
    %v1066 = vunpack.c.l.b16 %v1030
    %v1067 = vunpack.c.l.b16 %v1031
    %v1068 = vunpack.c.l.b16 %v1032
    %v1069 = vpack.c.b16 %v1054, %v1053
    %v1070 = vpack.c.b16 %v1056, %v1055
    %v1071 = vpack.c.b16 %v1058, %v1057
    %v1072 = vpack.c.b16 %v1060, %v1059
    %v1073 = vpack.c.b16 %v1062, %v1061
    %v1074 = vpack.c.b16 %v1064, %v1063
    %v1075 = vpack.c.b16 %v1066, %v1065
    %v1076 = vpack.c.b16 %v1068, %v1067
    %1085 = vmatprep.subr.bf16.mxu0 0
    %1086 = vmatpush1.bf16.msra.mxu0 %v1069
    %1087 = vmatprep.subr.bf16.mxu0 0
    %1088 = vmatpush1.bf16.msra.mxu0 %v1070
    %1089 = vmatprep.subr.bf16.mxu0 0
    %1090 = vmatpush1.bf16.msra.mxu0 %v1071
    %1091 = vmatprep.subr.bf16.mxu0 0
    %1092 = vmatpush1.bf16.msra.mxu0 %v1072
    %1093 = vmatprep.subr.bf16.mxu0 0
    %1094 = vmatpush1.bf16.msra.mxu0 %v1073
    %1095 = vmatprep.subr.bf16.mxu0 0
    %1096 = vmatpush1.bf16.msra.mxu0 %v1074
    %1097 = vmatprep.subr.bf16.mxu0 0
    %1098 = vmatpush1.bf16.msra.mxu0 %v1075
    %1099 = vmatprep.subr.bf16.mxu0 0
    %1100 = vmatpush1.bf16.msra.mxu0 %v1076
    %1101 = vmatprep.subr.bf16.mxu0 0
    %1102 = vmatpush1.bf16.msra.mxu0 0
    %1103 = vmatprep.subr.bf16.mxu0 0
    %1104 = vmatpush1.bf16.msra.mxu0 0
    %1105 = vmatprep.subr.bf16.mxu0 0
    %1106 = vmatpush1.bf16.msra.mxu0 0
    %1107 = vmatprep.subr.bf16.mxu0 0
    %1108 = vmatpush1.bf16.msra.mxu0 0
    %1109 = vmatprep.subr.bf16.mxu0 0
    %1110 = vmatpush1.bf16.msra.mxu0 0
    %1111 = vmatprep.subr.bf16.mxu0 0
    %1112 = vmatpush1.bf16.msra.mxu0 0
    %1113 = vmatprep.subr.bf16.mxu0 0
    %1114 = vmatpush1.bf16.msra.mxu0 0
    %1115 = vmatprep.subr.bf16.mxu0 0
    %1116 = vmatpush1.bf16.msra.mxu0 0
    %1117 = vmatprep.mubr.bf16.mxu0 0
    %1118 = vmatmul.mubr.bf16.gmra.mrb[0].mxu0 %v971
    %v1119 = vpop.f32.mrb[0].mxu0
    %v1120 = vadd.f32 %v1036, %v1119
    %v1121 = vpop.f32.mrb[0].mxu0
    %v1122 = vpop.f32.mrb[0].mxu0
    %v1123 = vadd.f32 %v1036, %v1122
    %v1124 = vpop.f32.mrb[0].mxu0
    %1125 = vdwg.mxu0
    %v1126 = vmax.f32 %v1120, 0.0
    %v1127 = vmax.f32 %v1123, 0.0
    %v1128 = vpack.c.bf16 %v1127, %v1126
    %1129 = vmatprep.subr.bf16.mxu0 0
    %1130 = vmatpush1.bf16.msra.mxu0 %v1069
    %1131 = vmatprep.subr.bf16.mxu0 0
    %1132 = vmatpush1.bf16.msra.mxu0 %v1070
    %1133 = vmatprep.subr.bf16.mxu0 0
    %1134 = vmatpush1.bf16.msra.mxu0 %v1071
    %1135 = vmatprep.subr.bf16.mxu0 0
    %1136 = vmatpush1.bf16.msra.mxu0 %v1072
    %1137 = vmatprep.subr.bf16.mxu0 0
    %1138 = vmatpush1.bf16.msra.mxu0 %v1073
    %1139 = vmatprep.subr.bf16.mxu0 0
    %1140 = vmatpush1.bf16.msra.mxu0 %v1074
    %1141 = vmatprep.subr.bf16.mxu0 0
    %1142 = vmatpush1.bf16.msra.mxu0 %v1075
    %1143 = vmatprep.subr.bf16.mxu0 0
    %1144 = vmatpush1.bf16.msra.mxu0 %v1076
    %1145 = vmatprep.subr.bf16.mxu0 0
    %1146 = vmatpush1.bf16.msra.mxu0 0
    %1147 = vmatprep.subr.bf16.mxu0 0
    %1148 = vmatpush1.bf16.msra.mxu0 0
    %1149 = vmatprep.subr.bf16.mxu0 0
    %1150 = vmatpush1.bf16.msra.mxu0 0
    %1151 = vmatprep.subr.bf16.mxu0 0
    %1152 = vmatpush1.bf16.msra.mxu0 0
    %1153 = vmatprep.subr.bf16.mxu0 0
    %1154 = vmatpush1.bf16.msra.mxu0 0
    %1155 = vmatprep.subr.bf16.mxu0 0
    %1156 = vmatpush1.bf16.msra.mxu0 0
    %1157 = vmatprep.subr.bf16.mxu0 0
    %1158 = vmatpush1.bf16.msra.mxu0 0
    %1159 = vmatprep.subr.bf16.mxu0 0
    %1160 = vmatpush1.bf16.msra.mxu0 0
    %1161 = vmatprep.mubr.bf16.mxu0 0
    %1162 = vmatmul.mubr.bf16.gmra.mrb[0].mxu0 %v1015
    %v1163 = vpop.f32.mrb[0].mxu0
    %v1164 = vadd.f32 %v1036, %v1163
    %v1165 = vpop.f32.mrb[0].mxu0
    %v1166 = vpop.f32.mrb[0].mxu0
    %v1167 = vadd.f32 %v1036, %v1166
    %v1168 = vpop.f32.mrb[0].mxu0
    %1169 = vdwg.mxu0
    %v1170 = vmax.f32 %v1164, 0.0
    %v1171 = vmax.f32 %v1167, 0.0
    %v1172 = vpack.c.bf16 %v1171, %v1170
    %s1173 = scalar_lea.vmem [#allocation5], 448
    %v1174 = vld [vmem:[%s1173] sm:$0xf]
    %v1175 = vld [vmem:[%s1173 + $0x4] sm:$0xf]
    %v1176 = vld [vmem:[%s1173 + $0x8] sm:$0xf]
    %v1177 = vld [vmem:[%s1173 + $0xc] sm:$0xf]
    %v1178 = vld [vmem:[%s1173 + $0x10] sm:$0xf]
    %v1179 = vld [vmem:[%s1173 + $0x14] sm:$0xf]
    %v1180 = vld [vmem:[%s1173 + $0x18] sm:$0xf]
    %v1181 = vld [vmem:[%s1173 + $0x1c] sm:$0xf]
    %v1182 = vld [vmem:[%s1173 + $0x20] sm:$0xf]
    %v1183 = vld [vmem:[%s1173 + $0x24] sm:$0xf]
    %v1184 = vld [vmem:[%s1173 + $0x28] sm:$0xf]
    %v1185 = vld [vmem:[%s1173 + $0x2c] sm:$0xf]
    %v1186 = vld [vmem:[%s1173 + $0x30] sm:$0xf]
    %v1187 = vld [vmem:[%s1173 + $0x34] sm:$0xf]
    %v1188 = vld [vmem:[%s1173 + $0x38] sm:$0xf]
    %v1189 = vld [vmem:[%s1173 + $0x3c] sm:$0xf]
    %v1190 = vlaneseq
    %v1191 = vshrl.u32 %v1190, 7
    %v1192 = vsub.s32 7, %v1191
    %v1193 = vrot.slane %v61, %v1192
    %v1210 = vunpack.c.l.b16 %v1174
    %v1211 = vunpack.c.l.b16 %v1175
    %v1212 = vunpack.c.l.b16 %v1176
    %v1213 = vunpack.c.l.b16 %v1177
    %v1214 = vunpack.c.l.b16 %v1178
    %v1215 = vunpack.c.l.b16 %v1179
    %v1216 = vunpack.c.l.b16 %v1180
    %v1217 = vunpack.c.l.b16 %v1181
    %v1218 = vunpack.c.l.b16 %v1182
    %v1219 = vunpack.c.l.b16 %v1183
    %v1220 = vunpack.c.l.b16 %v1184
    %v1221 = vunpack.c.l.b16 %v1185
    %v1222 = vunpack.c.l.b16 %v1186
    %v1223 = vunpack.c.l.b16 %v1187
    %v1224 = vunpack.c.l.b16 %v1188
    %v1225 = vunpack.c.l.b16 %v1189
    %v1226 = vpack.c.b16 %v1211, %v1210
    %v1227 = vpack.c.b16 %v1213, %v1212
    %v1228 = vpack.c.b16 %v1215, %v1214
    %v1229 = vpack.c.b16 %v1217, %v1216
    %v1230 = vpack.c.b16 %v1219, %v1218
    %v1231 = vpack.c.b16 %v1221, %v1220
    %v1232 = vpack.c.b16 %v1223, %v1222
    %v1233 = vpack.c.b16 %v1225, %v1224
    %1242 = vmatprep.subr.bf16.mxu0 0
    %1243 = vmatpush1.bf16.msra.mxu0 %v1226
    %1244 = vmatprep.subr.bf16.mxu0 0
    %1245 = vmatpush1.bf16.msra.mxu0 %v1227
    %1246 = vmatprep.subr.bf16.mxu0 0
    %1247 = vmatpush1.bf16.msra.mxu0 %v1228
    %1248 = vmatprep.subr.bf16.mxu0 0
    %1249 = vmatpush1.bf16.msra.mxu0 %v1229
    %1250 = vmatprep.subr.bf16.mxu0 0
    %1251 = vmatpush1.bf16.msra.mxu0 %v1230
    %1252 = vmatprep.subr.bf16.mxu0 0
    %1253 = vmatpush1.bf16.msra.mxu0 %v1231
    %1254 = vmatprep.subr.bf16.mxu0 0
    %1255 = vmatpush1.bf16.msra.mxu0 %v1232
    %1256 = vmatprep.subr.bf16.mxu0 0
    %1257 = vmatpush1.bf16.msra.mxu0 %v1233
    %1258 = vmatprep.subr.bf16.mxu0 0
    %1259 = vmatpush1.bf16.msra.mxu0 0
    %1260 = vmatprep.subr.bf16.mxu0 0
    %1261 = vmatpush1.bf16.msra.mxu0 0
    %1262 = vmatprep.subr.bf16.mxu0 0
    %1263 = vmatpush1.bf16.msra.mxu0 0
    %1264 = vmatprep.subr.bf16.mxu0 0
    %1265 = vmatpush1.bf16.msra.mxu0 0
    %1266 = vmatprep.subr.bf16.mxu0 0
    %1267 = vmatpush1.bf16.msra.mxu0 0
    %1268 = vmatprep.subr.bf16.mxu0 0
    %1269 = vmatpush1.bf16.msra.mxu0 0
    %1270 = vmatprep.subr.bf16.mxu0 0
    %1271 = vmatpush1.bf16.msra.mxu0 0
    %1272 = vmatprep.subr.bf16.mxu0 0
    %1273 = vmatpush1.bf16.msra.mxu0 0
    %1274 = vmatprep.mubr.bf16.mxu0 0
    %1275 = vmatmul.mubr.bf16.gmra.mrb[0].mxu0 %v1128
    %v1276 = vpop.f32.mrb[0].mxu0
    %v1277 = vadd.f32 %v1193, %v1276
    %v1278 = vpop.f32.mrb[0].mxu0
    %v1279 = vpop.f32.mrb[0].mxu0
    %v1280 = vadd.f32 %v1193, %v1279
    %v1281 = vpop.f32.mrb[0].mxu0
    %1282 = vdwg.mxu0
    %v1283 = vmax.f32 %v1277, 0.0
    %v1284 = vmax.f32 %v1280, 0.0
    %v1285 = vpack.c.bf16 %v1284, %v1283
    %1286 = vmatprep.subr.bf16.mxu0 0
    %1287 = vmatpush1.bf16.msra.mxu0 %v1226
    %1288 = vmatprep.subr.bf16.mxu0 0
    %1289 = vmatpush1.bf16.msra.mxu0 %v1227
    %1290 = vmatprep.subr.bf16.mxu0 0
    %1291 = vmatpush1.bf16.msra.mxu0 %v1228
    %1292 = vmatprep.subr.bf16.mxu0 0
    %1293 = vmatpush1.bf16.msra.mxu0 %v1229
    %1294 = vmatprep.subr.bf16.mxu0 0
    %1295 = vmatpush1.bf16.msra.mxu0 %v1230
    %1296 = vmatprep.subr.bf16.mxu0 0
    %1297 = vmatpush1.bf16.msra.mxu0 %v1231
    %1298 = vmatprep.subr.bf16.mxu0 0
    %1299 = vmatpush1.bf16.msra.mxu0 %v1232
    %1300 = vmatprep.subr.bf16.mxu0 0
    %1301 = vmatpush1.bf16.msra.mxu0 %v1233
    %1302 = vmatprep.subr.bf16.mxu0 0
    %1303 = vmatpush1.bf16.msra.mxu0 0
    %1304 = vmatprep.subr.bf16.mxu0 0
    %1305 = vmatpush1.bf16.msra.mxu0 0
    %1306 = vmatprep.subr.bf16.mxu0 0
    %1307 = vmatpush1.bf16.msra.mxu0 0
    %1308 = vmatprep.subr.bf16.mxu0 0
    %1309 = vmatpush1.bf16.msra.mxu0 0
    %1310 = vmatprep.subr.bf16.mxu0 0
    %1311 = vmatpush1.bf16.msra.mxu0 0
    %1312 = vmatprep.subr.bf16.mxu0 0
    %1313 = vmatpush1.bf16.msra.mxu0 0
    %1314 = vmatprep.subr.bf16.mxu0 0
    %1315 = vmatpush1.bf16.msra.mxu0 0
    %1316 = vmatprep.subr.bf16.mxu0 0
    %1317 = vmatpush1.bf16.msra.mxu0 0
    %1318 = vmatprep.mubr.bf16.mxu0 0
    %1319 = vmatmul.mubr.bf16.gmra.mrb[0].mxu0 %v1172
    %v1320 = vpop.f32.mrb[0].mxu0
    %v1321 = vadd.f32 %v1193, %v1320
    %v1322 = vpop.f32.mrb[0].mxu0
    %v1323 = vpop.f32.mrb[0].mxu0
    %v1324 = vadd.f32 %v1193, %v1323
    %v1325 = vpop.f32.mrb[0].mxu0
    %1326 = vdwg.mxu0
    %v1327 = vmax.f32 %v1321, 0.0
    %v1328 = vmax.f32 %v1324, 0.0
    %v1329 = vpack.c.bf16 %v1328, %v1327
    %s1330 = scalar_lea.vmem [#allocation5], 512
    %v1331 = vld [vmem:[%s1330] sm:$0xf]
    %v1332 = vld [vmem:[%s1330 + $0x4] sm:$0xf]
    %v1333 = vld [vmem:[%s1330 + $0x8] sm:$0xf]
    %v1334 = vld [vmem:[%s1330 + $0xc] sm:$0xf]
    %v1335 = vld [vmem:[%s1330 + $0x10] sm:$0xf]
    %v1336 = vld [vmem:[%s1330 + $0x14] sm:$0xf]
    %v1337 = vld [vmem:[%s1330 + $0x18] sm:$0xf]
    %v1338 = vld [vmem:[%s1330 + $0x1c] sm:$0xf]
    %v1339 = vld [vmem:[%s1330 + $0x20] sm:$0xf]
    %v1340 = vld [vmem:[%s1330 + $0x24] sm:$0xf]
    %v1341 = vld [vmem:[%s1330 + $0x28] sm:$0xf]
    %v1342 = vld [vmem:[%s1330 + $0x2c] sm:$0xf]
    %v1343 = vld [vmem:[%s1330 + $0x30] sm:$0xf]
    %v1344 = vld [vmem:[%s1330 + $0x34] sm:$0xf]
    %v1345 = vld [vmem:[%s1330 + $0x38] sm:$0xf]
    %v1346 = vld [vmem:[%s1330 + $0x3c] sm:$0xf]
    %v1347 = vlaneseq
    %v1348 = vshrl.u32 %v1347, 7
    %v1349 = vsub.s32 0, %v1348
    %v1350 = vrot.slane %v62, %v1349
    %v1367 = vunpack.c.l.b16 %v1331
    %v1368 = vunpack.c.l.b16 %v1332
    %v1369 = vunpack.c.l.b16 %v1333
    %v1370 = vunpack.c.l.b16 %v1334
    %v1371 = vunpack.c.l.b16 %v1335
    %v1372 = vunpack.c.l.b16 %v1336
    %v1373 = vunpack.c.l.b16 %v1337
    %v1374 = vunpack.c.l.b16 %v1338
    %v1375 = vunpack.c.l.b16 %v1339
    %v1376 = vunpack.c.l.b16 %v1340
    %v1377 = vunpack.c.l.b16 %v1341
    %v1378 = vunpack.c.l.b16 %v1342
    %v1379 = vunpack.c.l.b16 %v1343
    %v1380 = vunpack.c.l.b16 %v1344
    %v1381 = vunpack.c.l.b16 %v1345
    %v1382 = vunpack.c.l.b16 %v1346
    %v1383 = vpack.c.b16 %v1368, %v1367
    %v1384 = vpack.c.b16 %v1370, %v1369
    %v1385 = vpack.c.b16 %v1372, %v1371
    %v1386 = vpack.c.b16 %v1374, %v1373
    %v1387 = vpack.c.b16 %v1376, %v1375
    %v1388 = vpack.c.b16 %v1378, %v1377
    %v1389 = vpack.c.b16 %v1380, %v1379
    %v1390 = vpack.c.b16 %v1382, %v1381
    %1399 = vmatprep.subr.bf16.mxu0 0
    %1400 = vmatpush1.bf16.msra.mxu0 %v1383
    %1401 = vmatprep.subr.bf16.mxu0 0
    %1402 = vmatpush1.bf16.msra.mxu0 %v1384
    %1403 = vmatprep.subr.bf16.mxu0 0
    %1404 = vmatpush1.bf16.msra.mxu0 %v1385
    %1405 = vmatprep.subr.bf16.mxu0 0
    %1406 = vmatpush1.bf16.msra.mxu0 %v1386
    %1407 = vmatprep.subr.bf16.mxu0 0
    %1408 = vmatpush1.bf16.msra.mxu0 %v1387
    %1409 = vmatprep.subr.bf16.mxu0 0
    %1410 = vmatpush1.bf16.msra.mxu0 %v1388
    %1411 = vmatprep.subr.bf16.mxu0 0
    %1412 = vmatpush1.bf16.msra.mxu0 %v1389
    %1413 = vmatprep.subr.bf16.mxu0 0
    %1414 = vmatpush1.bf16.msra.mxu0 %v1390
    %1415 = vmatprep.subr.bf16.mxu0 0
    %1416 = vmatpush1.bf16.msra.mxu0 0
    %1417 = vmatprep.subr.bf16.mxu0 0
    %1418 = vmatpush1.bf16.msra.mxu0 0
    %1419 = vmatprep.subr.bf16.mxu0 0
    %1420 = vmatpush1.bf16.msra.mxu0 0
    %1421 = vmatprep.subr.bf16.mxu0 0
    %1422 = vmatpush1.bf16.msra.mxu0 0
    %1423 = vmatprep.subr.bf16.mxu0 0
    %1424 = vmatpush1.bf16.msra.mxu0 0
    %1425 = vmatprep.subr.bf16.mxu0 0
    %1426 = vmatpush1.bf16.msra.mxu0 0
    %1427 = vmatprep.subr.bf16.mxu0 0
    %1428 = vmatpush1.bf16.msra.mxu0 0
    %1429 = vmatprep.subr.bf16.mxu0 0
    %1430 = vmatpush1.bf16.msra.mxu0 0
    %1431 = vmatprep.mubr.bf16.mxu0 0
    %1432 = vmatmul.mubr.bf16.gmra.mrb[0].mxu0 %v1285
    %v1433 = vpop.f32.mrb[0].mxu0
    %v1434 = vadd.f32 %v1350, %v1433
    %v1435 = vpop.f32.mrb[0].mxu0
    %v1436 = vpop.f32.mrb[0].mxu0
    %v1437 = vadd.f32 %v1350, %v1436
    %v1438 = vpop.f32.mrb[0].mxu0
    %1439 = vdwg.mxu0
    %v1440 = vmax.f32 %v1434, 0.0
    %v1441 = vmax.f32 %v1437, 0.0
    %v1442 = vpack.c.bf16 %v1441, %v1440
    %1443 = vmatprep.subr.bf16.mxu0 0
    %1444 = vmatpush1.bf16.msra.mxu0 %v1383
    %1445 = vmatprep.subr.bf16.mxu0 0
    %1446 = vmatpush1.bf16.msra.mxu0 %v1384
    %1447 = vmatprep.subr.bf16.mxu0 0
    %1448 = vmatpush1.bf16.msra.mxu0 %v1385
    %1449 = vmatprep.subr.bf16.mxu0 0
    %1450 = vmatpush1.bf16.msra.mxu0 %v1386
    %1451 = vmatprep.subr.bf16.mxu0 0
    %1452 = vmatpush1.bf16.msra.mxu0 %v1387
    %1453 = vmatprep.subr.bf16.mxu0 0
    %1454 = vmatpush1.bf16.msra.mxu0 %v1388
    %1455 = vmatprep.subr.bf16.mxu0 0
    %1456 = vmatpush1.bf16.msra.mxu0 %v1389
    %1457 = vmatprep.subr.bf16.mxu0 0
    %1458 = vmatpush1.bf16.msra.mxu0 %v1390
    %1459 = vmatprep.subr.bf16.mxu0 0
    %1460 = vmatpush1.bf16.msra.mxu0 0
    %1461 = vmatprep.subr.bf16.mxu0 0
    %1462 = vmatpush1.bf16.msra.mxu0 0
    %1463 = vmatprep.subr.bf16.mxu0 0
    %1464 = vmatpush1.bf16.msra.mxu0 0
    %1465 = vmatprep.subr.bf16.mxu0 0
    %1466 = vmatpush1.bf16.msra.mxu0 0
    %1467 = vmatprep.subr.bf16.mxu0 0
    %1468 = vmatpush1.bf16.msra.mxu0 0
    %1469 = vmatprep.subr.bf16.mxu0 0
    %1470 = vmatpush1.bf16.msra.mxu0 0
    %1471 = vmatprep.subr.bf16.mxu0 0
    %1472 = vmatpush1.bf16.msra.mxu0 0
    %1473 = vmatprep.subr.bf16.mxu0 0
    %1474 = vmatpush1.bf16.msra.mxu0 0
    %1475 = vmatprep.mubr.bf16.mxu0 0
    %1476 = vmatmul.mubr.bf16.gmra.mrb[0].mxu0 %v1329
    %v1477 = vpop.f32.mrb[0].mxu0
    %v1478 = vadd.f32 %v1350, %v1477
    %v1479 = vpop.f32.mrb[0].mxu0
    %v1480 = vpop.f32.mrb[0].mxu0
    %v1481 = vadd.f32 %v1350, %v1480
    %v1482 = vpop.f32.mrb[0].mxu0
    %1483 = vdwg.mxu0
    %v1484 = vmax.f32 %v1478, 0.0
    %v1485 = vmax.f32 %v1481, 0.0
    %v1486 = vpack.c.bf16 %v1485, %v1484
    %s1487 = scalar_lea.vmem [#allocation5], 576
    %v1488 = vld [vmem:[%s1487] sm:$0xf]
    %v1489 = vld [vmem:[%s1487 + $0x4] sm:$0xf]
    %v1490 = vld [vmem:[%s1487 + $0x8] sm:$0xf]
    %v1491 = vld [vmem:[%s1487 + $0xc] sm:$0xf]
    %v1492 = vld [vmem:[%s1487 + $0x10] sm:$0xf]
    %v1493 = vld [vmem:[%s1487 + $0x14] sm:$0xf]
    %v1494 = vld [vmem:[%s1487 + $0x18] sm:$0xf]
    %v1495 = vld [vmem:[%s1487 + $0x1c] sm:$0xf]
    %v1496 = vld [vmem:[%s1487 + $0x20] sm:$0xf]
    %v1497 = vld [vmem:[%s1487 + $0x24] sm:$0xf]
    %v1498 = vld [vmem:[%s1487 + $0x28] sm:$0xf]
    %v1499 = vld [vmem:[%s1487 + $0x2c] sm:$0xf]
    %v1500 = vld [vmem:[%s1487 + $0x30] sm:$0xf]
    %v1501 = vld [vmem:[%s1487 + $0x34] sm:$0xf]
    %v1502 = vld [vmem:[%s1487 + $0x38] sm:$0xf]
    %v1503 = vld [vmem:[%s1487 + $0x3c] sm:$0xf]
    %v1504 = vlaneseq
    %v1505 = vshrl.u32 %v1504, 7
    %v1506 = vsub.s32 1, %v1505
    %v1507 = vrot.slane %v62, %v1506
    %v1524 = vunpack.c.l.b16 %v1488
    %v1525 = vunpack.c.l.b16 %v1489
    %v1526 = vunpack.c.l.b16 %v1490
    %v1527 = vunpack.c.l.b16 %v1491
    %v1528 = vunpack.c.l.b16 %v1492
    %v1529 = vunpack.c.l.b16 %v1493
    %v1530 = vunpack.c.l.b16 %v1494
    %v1531 = vunpack.c.l.b16 %v1495
    %v1532 = vunpack.c.l.b16 %v1496
    %v1533 = vunpack.c.l.b16 %v1497
    %v1534 = vunpack.c.l.b16 %v1498
    %v1535 = vunpack.c.l.b16 %v1499
    %v1536 = vunpack.c.l.b16 %v1500
    %v1537 = vunpack.c.l.b16 %v1501
    %v1538 = vunpack.c.l.b16 %v1502
    %v1539 = vunpack.c.l.b16 %v1503
    %v1540 = vpack.c.b16 %v1525, %v1524
    %v1541 = vpack.c.b16 %v1527, %v1526
    %v1542 = vpack.c.b16 %v1529, %v1528
    %v1543 = vpack.c.b16 %v1531, %v1530
    %v1544 = vpack.c.b16 %v1533, %v1532
    %v1545 = vpack.c.b16 %v1535, %v1534
    %v1546 = vpack.c.b16 %v1537, %v1536
    %v1547 = vpack.c.b16 %v1539, %v1538
    %1556 = vmatprep.subr.bf16.mxu0 0
    %1557 = vmatpush1.bf16.msra.mxu0 %v1540
    %1558 = vmatprep.subr.bf16.mxu0 0
    %1559 = vmatpush1.bf16.msra.mxu0 %v1541
    %1560 = vmatprep.subr.bf16.mxu0 0
    %1561 = vmatpush1.bf16.msra.mxu0 %v1542
    %1562 = vmatprep.subr.bf16.mxu0 0
    %1563 = vmatpush1.bf16.msra.mxu0 %v1543
    %1564 = vmatprep.subr.bf16.mxu0 0
    %1565 = vmatpush1.bf16.msra.mxu0 %v1544
    %1566 = vmatprep.subr.bf16.mxu0 0
    %1567 = vmatpush1.bf16.msra.mxu0 %v1545
    %1568 = vmatprep.subr.bf16.mxu0 0
    %1569 = vmatpush1.bf16.msra.mxu0 %v1546
    %1570 = vmatprep.subr.bf16.mxu0 0
    %1571 = vmatpush1.bf16.msra.mxu0 %v1547
    %1572 = vmatprep.subr.bf16.mxu0 0
    %1573 = vmatpush1.bf16.msra.mxu0 0
    %1574 = vmatprep.subr.bf16.mxu0 0
    %1575 = vmatpush1.bf16.msra.mxu0 0
    %1576 = vmatprep.subr.bf16.mxu0 0
    %1577 = vmatpush1.bf16.msra.mxu0 0
    %1578 = vmatprep.subr.bf16.mxu0 0
    %1579 = vmatpush1.bf16.msra.mxu0 0
    %1580 = vmatprep.subr.bf16.mxu0 0
    %1581 = vmatpush1.bf16.msra.mxu0 0
    %1582 = vmatprep.subr.bf16.mxu0 0
    %1583 = vmatpush1.bf16.msra.mxu0 0
    %1584 = vmatprep.subr.bf16.mxu0 0
    %1585 = vmatpush1.bf16.msra.mxu0 0
    %1586 = vmatprep.subr.bf16.mxu0 0
    %1587 = vmatpush1.bf16.msra.mxu0 0
    %1588 = vmatprep.mubr.bf16.mxu0 0
    %1589 = vmatmul.mubr.bf16.gmra.mrb[0].mxu0 %v1442
    %v1590 = vpop.f32.mrb[0].mxu0
    %v1591 = vadd.f32 %v1507, %v1590
    %v1592 = vpop.f32.mrb[0].mxu0
    %v1593 = vpop.f32.mrb[0].mxu0
    %v1594 = vadd.f32 %v1507, %v1593
    %v1595 = vpop.f32.mrb[0].mxu0
    %1596 = vdwg.mxu0
    %v1597 = vmax.f32 %v1591, 0.0
    %v1598 = vmax.f32 %v1594, 0.0
    %v1599 = vpack.c.bf16 %v1598, %v1597
    %1600 = vmatprep.subr.bf16.mxu0 0
    %1601 = vmatpush1.bf16.msra.mxu0 %v1540
    %1602 = vmatprep.subr.bf16.mxu0 0
    %1603 = vmatpush1.bf16.msra.mxu0 %v1541
    %1604 = vmatprep.subr.bf16.mxu0 0
    %1605 = vmatpush1.bf16.msra.mxu0 %v1542
    %1606 = vmatprep.subr.bf16.mxu0 0
    %1607 = vmatpush1.bf16.msra.mxu0 %v1543
    %1608 = vmatprep.subr.bf16.mxu0 0
    %1609 = vmatpush1.bf16.msra.mxu0 %v1544
    %1610 = vmatprep.subr.bf16.mxu0 0
    %1611 = vmatpush1.bf16.msra.mxu0 %v1545
    %1612 = vmatprep.subr.bf16.mxu0 0
    %1613 = vmatpush1.bf16.msra.mxu0 %v1546
    %1614 = vmatprep.subr.bf16.mxu0 0
    %1615 = vmatpush1.bf16.msra.mxu0 %v1547
    %1616 = vmatprep.subr.bf16.mxu0 0
    %1617 = vmatpush1.bf16.msra.mxu0 0
    %1618 = vmatprep.subr.bf16.mxu0 0
    %1619 = vmatpush1.bf16.msra.mxu0 0
    %1620 = vmatprep.subr.bf16.mxu0 0
    %1621 = vmatpush1.bf16.msra.mxu0 0
    %1622 = vmatprep.subr.bf16.mxu0 0
    %1623 = vmatpush1.bf16.msra.mxu0 0
    %1624 = vmatprep.subr.bf16.mxu0 0
    %1625 = vmatpush1.bf16.msra.mxu0 0
    %1626 = vmatprep.subr.bf16.mxu0 0
    %1627 = vmatpush1.bf16.msra.mxu0 0
    %1628 = vmatprep.subr.bf16.mxu0 0
    %1629 = vmatpush1.bf16.msra.mxu0 0
    %1630 = vmatprep.subr.bf16.mxu0 0
    %1631 = vmatpush1.bf16.msra.mxu0 0
    %1632 = vmatprep.mubr.bf16.mxu0 0
    %1633 = vmatmul.mubr.bf16.gmra.mrb[0].mxu0 %v1486
    %v1634 = vpop.f32.mrb[0].mxu0
    %v1635 = vadd.f32 %v1507, %v1634
    %v1636 = vpop.f32.mrb[0].mxu0
    %v1637 = vpop.f32.mrb[0].mxu0
    %v1638 = vadd.f32 %v1507, %v1637
    %v1639 = vpop.f32.mrb[0].mxu0
    %1640 = vdwg.mxu0
    %v1641 = vmax.f32 %v1635, 0.0
    %v1642 = vmax.f32 %v1638, 0.0
    %v1643 = vpack.c.bf16 %v1642, %v1641
    %s1644 = scalar_lea.vmem [#allocation5], 640
    %v1645 = vld [vmem:[%s1644] sm:$0xf]
    %v1646 = vld [vmem:[%s1644 + $0x4] sm:$0xf]
    %v1647 = vld [vmem:[%s1644 + $0x8] sm:$0xf]
    %v1648 = vld [vmem:[%s1644 + $0xc] sm:$0xf]
    %v1649 = vld [vmem:[%s1644 + $0x10] sm:$0xf]
    %v1650 = vld [vmem:[%s1644 + $0x14] sm:$0xf]
    %v1651 = vld [vmem:[%s1644 + $0x18] sm:$0xf]
    %v1652 = vld [vmem:[%s1644 + $0x1c] sm:$0xf]
    %v1653 = vld [vmem:[%s1644 + $0x20] sm:$0xf]
    %v1654 = vld [vmem:[%s1644 + $0x24] sm:$0xf]
    %v1655 = vld [vmem:[%s1644 + $0x28] sm:$0xf]
    %v1656 = vld [vmem:[%s1644 + $0x2c] sm:$0xf]
    %v1657 = vld [vmem:[%s1644 + $0x30] sm:$0xf]
    %v1658 = vld [vmem:[%s1644 + $0x34] sm:$0xf]
    %v1659 = vld [vmem:[%s1644 + $0x38] sm:$0xf]
    %v1660 = vld [vmem:[%s1644 + $0x3c] sm:$0xf]
    %v1661 = vlaneseq
    %v1662 = vshrl.u32 %v1661, 7
    %v1663 = vsub.s32 2, %v1662
    %v1664 = vrot.slane %v62, %v1663
    %v1681 = vunpack.c.l.b16 %v1645
    %v1682 = vunpack.c.l.b16 %v1646
    %v1683 = vunpack.c.l.b16 %v1647
    %v1684 = vunpack.c.l.b16 %v1648
    %v1685 = vunpack.c.l.b16 %v1649
    %v1686 = vunpack.c.l.b16 %v1650
    %v1687 = vunpack.c.l.b16 %v1651
    %v1688 = vunpack.c.l.b16 %v1652
    %v1689 = vunpack.c.l.b16 %v1653
    %v1690 = vunpack.c.l.b16 %v1654
    %v1691 = vunpack.c.l.b16 %v1655
    %v1692 = vunpack.c.l.b16 %v1656
    %v1693 = vunpack.c.l.b16 %v1657
    %v1694 = vunpack.c.l.b16 %v1658
    %v1695 = vunpack.c.l.b16 %v1659
    %v1696 = vunpack.c.l.b16 %v1660
    %v1697 = vpack.c.b16 %v1682, %v1681
    %v1698 = vpack.c.b16 %v1684, %v1683
    %v1699 = vpack.c.b16 %v1686, %v1685
    %v1700 = vpack.c.b16 %v1688, %v1687
    %v1701 = vpack.c.b16 %v1690, %v1689
    %v1702 = vpack.c.b16 %v1692, %v1691
    %v1703 = vpack.c.b16 %v1694, %v1693
    %v1704 = vpack.c.b16 %v1696, %v1695
    %1713 = vmatprep.subr.bf16.mxu0 0
    %1714 = vmatpush1.bf16.msra.mxu0 %v1697
    %1715 = vmatprep.subr.bf16.mxu0 0
    %1716 = vmatpush1.bf16.msra.mxu0 %v1698
    %1717 = vmatprep.subr.bf16.mxu0 0
    %1718 = vmatpush1.bf16.msra.mxu0 %v1699
    %1719 = vmatprep.subr.bf16.mxu0 0
    %1720 = vmatpush1.bf16.msra.mxu0 %v1700
    %1721 = vmatprep.subr.bf16.mxu0 0
    %1722 = vmatpush1.bf16.msra.mxu0 %v1701
    %1723 = vmatprep.subr.bf16.mxu0 0
    %1724 = vmatpush1.bf16.msra.mxu0 %v1702
    %1725 = vmatprep.subr.bf16.mxu0 0
    %1726 = vmatpush1.bf16.msra.mxu0 %v1703
    %1727 = vmatprep.subr.bf16.mxu0 0
    %1728 = vmatpush1.bf16.msra.mxu0 %v1704
    %1729 = vmatprep.subr.bf16.mxu0 0
    %1730 = vmatpush1.bf16.msra.mxu0 0
    %1731 = vmatprep.subr.bf16.mxu0 0
    %1732 = vmatpush1.bf16.msra.mxu0 0
    %1733 = vmatprep.subr.bf16.mxu0 0
    %1734 = vmatpush1.bf16.msra.mxu0 0
    %1735 = vmatprep.subr.bf16.mxu0 0
    %1736 = vmatpush1.bf16.msra.mxu0 0
    %1737 = vmatprep.subr.bf16.mxu0 0
    %1738 = vmatpush1.bf16.msra.mxu0 0
    %1739 = vmatprep.subr.bf16.mxu0 0
    %1740 = vmatpush1.bf16.msra.mxu0 0
    %1741 = vmatprep.subr.bf16.mxu0 0
    %1742 = vmatpush1.bf16.msra.mxu0 0
    %1743 = vmatprep.subr.bf16.mxu0 0
    %1744 = vmatpush1.bf16.msra.mxu0 0
    %1745 = vmatprep.mubr.bf16.mxu0 0
    %1746 = vmatmul.mubr.bf16.gmra.mrb[0].mxu0 %v1599
    %v1747 = vpop.f32.mrb[0].mxu0
    %v1748 = vadd.f32 %v1664, %v1747
    %v1749 = vpop.f32.mrb[0].mxu0
    %v1750 = vpop.f32.mrb[0].mxu0
    %v1751 = vadd.f32 %v1664, %v1750
    %v1752 = vpop.f32.mrb[0].mxu0
    %1753 = vdwg.mxu0
    %v1754 = vmax.f32 %v1748, 0.0
    %v1755 = vmax.f32 %v1751, 0.0
    %v1756 = vpack.c.bf16 %v1755, %v1754
    %1757 = vmatprep.subr.bf16.mxu0 0
    %1758 = vmatpush1.bf16.msra.mxu0 %v1697
    %1759 = vmatprep.subr.bf16.mxu0 0
    %1760 = vmatpush1.bf16.msra.mxu0 %v1698
    %1761 = vmatprep.subr.bf16.mxu0 0
    %1762 = vmatpush1.bf16.msra.mxu0 %v1699
    %1763 = vmatprep.subr.bf16.mxu0 0
    %1764 = vmatpush1.bf16.msra.mxu0 %v1700
    %1765 = vmatprep.subr.bf16.mxu0 0
    %1766 = vmatpush1.bf16.msra.mxu0 %v1701
    %1767 = vmatprep.subr.bf16.mxu0 0
    %1768 = vmatpush1.bf16.msra.mxu0 %v1702
    %1769 = vmatprep.subr.bf16.mxu0 0
    %1770 = vmatpush1.bf16.msra.mxu0 %v1703
    %1771 = vmatprep.subr.bf16.mxu0 0
    %1772 = vmatpush1.bf16.msra.mxu0 %v1704
    %1773 = vmatprep.subr.bf16.mxu0 0
    %1774 = vmatpush1.bf16.msra.mxu0 0
    %1775 = vmatprep.subr.bf16.mxu0 0
    %1776 = vmatpush1.bf16.msra.mxu0 0
    %1777 = vmatprep.subr.bf16.mxu0 0
    %1778 = vmatpush1.bf16.msra.mxu0 0
    %1779 = vmatprep.subr.bf16.mxu0 0
    %1780 = vmatpush1.bf16.msra.mxu0 0
    %1781 = vmatprep.subr.bf16.mxu0 0
    %1782 = vmatpush1.bf16.msra.mxu0 0
    %1783 = vmatprep.subr.bf16.mxu0 0
    %1784 = vmatpush1.bf16.msra.mxu0 0
    %1785 = vmatprep.subr.bf16.mxu0 0
    %1786 = vmatpush1.bf16.msra.mxu0 0
    %1787 = vmatprep.subr.bf16.mxu0 0
    %1788 = vmatpush1.bf16.msra.mxu0 0
    %1789 = vmatprep.mubr.bf16.mxu0 0
    %1790 = vmatmul.mubr.bf16.gmra.mrb[0].mxu0 %v1643
    %v1791 = vpop.f32.mrb[0].mxu0
    %v1792 = vadd.f32 %v1664, %v1791
    %v1793 = vpop.f32.mrb[0].mxu0
    %v1794 = vpop.f32.mrb[0].mxu0
    %v1795 = vadd.f32 %v1664, %v1794
    %v1796 = vpop.f32.mrb[0].mxu0
    %1797 = vdwg.mxu0
    %v1798 = vmax.f32 %v1792, 0.0
    %v1799 = vmax.f32 %v1795, 0.0
    %v1800 = vpack.c.bf16 %v1799, %v1798
    %s1801 = scalar_lea.vmem [#allocation5], 704
    %v1802 = vld [vmem:[%s1801] sm:$0xf]
    %v1803 = vld [vmem:[%s1801 + $0x4] sm:$0xf]
    %v1804 = vld [vmem:[%s1801 + $0x8] sm:$0xf]
    %v1805 = vld [vmem:[%s1801 + $0xc] sm:$0xf]
    %v1806 = vld [vmem:[%s1801 + $0x10] sm:$0xf]
    %v1807 = vld [vmem:[%s1801 + $0x14] sm:$0xf]
    %v1808 = vld [vmem:[%s1801 + $0x18] sm:$0xf]
    %v1809 = vld [vmem:[%s1801 + $0x1c] sm:$0xf]
    %v1810 = vld [vmem:[%s1801 + $0x20] sm:$0xf]
    %v1811 = vld [vmem:[%s1801 + $0x24] sm:$0xf]
    %v1812 = vld [vmem:[%s1801 + $0x28] sm:$0xf]
    %v1813 = vld [vmem:[%s1801 + $0x2c] sm:$0xf]
    %v1814 = vld [vmem:[%s1801 + $0x30] sm:$0xf]
    %v1815 = vld [vmem:[%s1801 + $0x34] sm:$0xf]
    %v1816 = vld [vmem:[%s1801 + $0x38] sm:$0xf]
    %v1817 = vld [vmem:[%s1801 + $0x3c] sm:$0xf]
    %v1818 = vlaneseq
    %v1819 = vshrl.u32 %v1818, 7
    %v1820 = vsub.s32 3, %v1819
    %v1821 = vrot.slane %v62, %v1820
    %v1838 = vunpack.c.l.b16 %v1802
    %v1839 = vunpack.c.l.b16 %v1803
    %v1840 = vunpack.c.l.b16 %v1804
    %v1841 = vunpack.c.l.b16 %v1805
    %v1842 = vunpack.c.l.b16 %v1806
    %v1843 = vunpack.c.l.b16 %v1807
    %v1844 = vunpack.c.l.b16 %v1808
    %v1845 = vunpack.c.l.b16 %v1809
    %v1846 = vunpack.c.l.b16 %v1810
    %v1847 = vunpack.c.l.b16 %v1811
    %v1848 = vunpack.c.l.b16 %v1812
    %v1849 = vunpack.c.l.b16 %v1813
    %v1850 = vunpack.c.l.b16 %v1814
    %v1851 = vunpack.c.l.b16 %v1815
    %v1852 = vunpack.c.l.b16 %v1816
    %v1853 = vunpack.c.l.b16 %v1817
    %v1854 = vpack.c.b16 %v1839, %v1838
    %v1855 = vpack.c.b16 %v1841, %v1840
    %v1856 = vpack.c.b16 %v1843, %v1842
    %v1857 = vpack.c.b16 %v1845, %v1844
    %v1858 = vpack.c.b16 %v1847, %v1846
    %v1859 = vpack.c.b16 %v1849, %v1848
    %v1860 = vpack.c.b16 %v1851, %v1850
    %v1861 = vpack.c.b16 %v1853, %v1852
    %1870 = vmatprep.subr.bf16.mxu0 0
    %1871 = vmatpush1.bf16.msra.mxu0 %v1854
    %1872 = vmatprep.subr.bf16.mxu0 0
    %1873 = vmatpush1.bf16.msra.mxu0 %v1855
    %1874 = vmatprep.subr.bf16.mxu0 0
    %1875 = vmatpush1.bf16.msra.mxu0 %v1856
    %1876 = vmatprep.subr.bf16.mxu0 0
    %1877 = vmatpush1.bf16.msra.mxu0 %v1857
    %1878 = vmatprep.subr.bf16.mxu0 0
    %1879 = vmatpush1.bf16.msra.mxu0 %v1858
    %1880 = vmatprep.subr.bf16.mxu0 0
    %1881 = vmatpush1.bf16.msra.mxu0 %v1859
    %1882 = vmatprep.subr.bf16.mxu0 0
    %1883 = vmatpush1.bf16.msra.mxu0 %v1860
    %1884 = vmatprep.subr.bf16.mxu0 0
    %1885 = vmatpush1.bf16.msra.mxu0 %v1861
    %1886 = vmatprep.subr.bf16.mxu0 0
    %1887 = vmatpush1.bf16.msra.mxu0 0
    %1888 = vmatprep.subr.bf16.mxu0 0
    %1889 = vmatpush1.bf16.msra.mxu0 0
    %1890 = vmatprep.subr.bf16.mxu0 0
    %1891 = vmatpush1.bf16.msra.mxu0 0
    %1892 = vmatprep.subr.bf16.mxu0 0
    %1893 = vmatpush1.bf16.msra.mxu0 0
    %1894 = vmatprep.subr.bf16.mxu0 0
    %1895 = vmatpush1.bf16.msra.mxu0 0
    %1896 = vmatprep.subr.bf16.mxu0 0
    %1897 = vmatpush1.bf16.msra.mxu0 0
    %1898 = vmatprep.subr.bf16.mxu0 0
    %1899 = vmatpush1.bf16.msra.mxu0 0
    %1900 = vmatprep.subr.bf16.mxu0 0
    %1901 = vmatpush1.bf16.msra.mxu0 0
    %1902 = vmatprep.mubr.bf16.mxu0 0
    %1903 = vmatmul.mubr.bf16.gmra.mrb[0].mxu0 %v1756
    %v1904 = vpop.f32.mrb[0].mxu0
    %v1905 = vadd.f32 %v1821, %v1904
    %v1906 = vpop.f32.mrb[0].mxu0
    %v1907 = vpop.f32.mrb[0].mxu0
    %v1908 = vadd.f32 %v1821, %v1907
    %v1909 = vpop.f32.mrb[0].mxu0
    %1910 = vdwg.mxu0
    %v1911 = vmax.f32 %v1905, 0.0
    %v1912 = vmax.f32 %v1908, 0.0
    %v1913 = vpack.c.bf16 %v1912, %v1911
    %1914 = vmatprep.subr.bf16.mxu0 0
    %1915 = vmatpush1.bf16.msra.mxu0 %v1854
    %1916 = vmatprep.subr.bf16.mxu0 0
    %1917 = vmatpush1.bf16.msra.mxu0 %v1855
    %1918 = vmatprep.subr.bf16.mxu0 0
    %1919 = vmatpush1.bf16.msra.mxu0 %v1856
    %1920 = vmatprep.subr.bf16.mxu0 0
    %1921 = vmatpush1.bf16.msra.mxu0 %v1857
    %1922 = vmatprep.subr.bf16.mxu0 0
    %1923 = vmatpush1.bf16.msra.mxu0 %v1858
    %1924 = vmatprep.subr.bf16.mxu0 0
    %1925 = vmatpush1.bf16.msra.mxu0 %v1859
    %1926 = vmatprep.subr.bf16.mxu0 0
    %1927 = vmatpush1.bf16.msra.mxu0 %v1860
    %1928 = vmatprep.subr.bf16.mxu0 0
    %1929 = vmatpush1.bf16.msra.mxu0 %v1861
    %1930 = vmatprep.subr.bf16.mxu0 0
    %1931 = vmatpush1.bf16.msra.mxu0 0
    %1932 = vmatprep.subr.bf16.mxu0 0
    %1933 = vmatpush1.bf16.msra.mxu0 0
    %1934 = vmatprep.subr.bf16.mxu0 0
    %1935 = vmatpush1.bf16.msra.mxu0 0
    %1936 = vmatprep.subr.bf16.mxu0 0
    %1937 = vmatpush1.bf16.msra.mxu0 0
    %1938 = vmatprep.subr.bf16.mxu0 0
    %1939 = vmatpush1.bf16.msra.mxu0 0
    %1940 = vmatprep.subr.bf16.mxu0 0
    %1941 = vmatpush1.bf16.msra.mxu0 0
    %1942 = vmatprep.subr.bf16.mxu0 0
    %1943 = vmatpush1.bf16.msra.mxu0 0
    %1944 = vmatprep.subr.bf16.mxu0 0
    %1945 = vmatpush1.bf16.msra.mxu0 0
    %1946 = vmatprep.mubr.bf16.mxu0 0
    %1947 = vmatmul.mubr.bf16.gmra.mrb[0].mxu0 %v1800
    %v1948 = vpop.f32.mrb[0].mxu0
    %v1949 = vadd.f32 %v1821, %v1948
    %v1950 = vpop.f32.mrb[0].mxu0
    %v1951 = vpop.f32.mrb[0].mxu0
    %v1952 = vadd.f32 %v1821, %v1951
    %v1953 = vpop.f32.mrb[0].mxu0
    %1954 = vdwg.mxu0
    %v1955 = vmax.f32 %v1949, 0.0
    %v1956 = vmax.f32 %v1952, 0.0
    %v1957 = vpack.c.bf16 %v1956, %v1955
    %s1958 = scalar_lea.vmem [#allocation5], 768
    %v1959 = vld [vmem:[%s1958] sm:$0xf]
    %v1960 = vld [vmem:[%s1958 + $0x4] sm:$0xf]
    %v1961 = vld [vmem:[%s1958 + $0x8] sm:$0xf]
    %v1962 = vld [vmem:[%s1958 + $0xc] sm:$0xf]
    %v1963 = vld [vmem:[%s1958 + $0x10] sm:$0xf]
    %v1964 = vld [vmem:[%s1958 + $0x14] sm:$0xf]
    %v1965 = vld [vmem:[%s1958 + $0x18] sm:$0xf]
    %v1966 = vld [vmem:[%s1958 + $0x1c] sm:$0xf]
    %v1967 = vld [vmem:[%s1958 + $0x20] sm:$0xf]
    %v1968 = vld [vmem:[%s1958 + $0x24] sm:$0xf]
    %v1969 = vld [vmem:[%s1958 + $0x28] sm:$0xf]
    %v1970 = vld [vmem:[%s1958 + $0x2c] sm:$0xf]
    %v1971 = vld [vmem:[%s1958 + $0x30] sm:$0xf]
    %v1972 = vld [vmem:[%s1958 + $0x34] sm:$0xf]
    %v1973 = vld [vmem:[%s1958 + $0x38] sm:$0xf]
    %v1974 = vld [vmem:[%s1958 + $0x3c] sm:$0xf]
    %v1975 = vlaneseq
    %v1976 = vshrl.u32 %v1975, 7
    %v1977 = vsub.s32 4, %v1976
    %v1978 = vrot.slane %v62, %v1977
    %v1995 = vunpack.c.l.b16 %v1959
    %v1996 = vunpack.c.l.b16 %v1960
    %v1997 = vunpack.c.l.b16 %v1961
    %v1998 = vunpack.c.l.b16 %v1962
    %v1999 = vunpack.c.l.b16 %v1963
    %v2000 = vunpack.c.l.b16 %v1964
    %v2001 = vunpack.c.l.b16 %v1965
    %v2002 = vunpack.c.l.b16 %v1966
    %v2003 = vunpack.c.l.b16 %v1967
    %v2004 = vunpack.c.l.b16 %v1968
    %v2005 = vunpack.c.l.b16 %v1969
    %v2006 = vunpack.c.l.b16 %v1970
    %v2007 = vunpack.c.l.b16 %v1971
    %v2008 = vunpack.c.l.b16 %v1972
    %v2009 = vunpack.c.l.b16 %v1973
    %v2010 = vunpack.c.l.b16 %v1974
    %v2011 = vpack.c.b16 %v1996, %v1995
    %v2012 = vpack.c.b16 %v1998, %v1997
    %v2013 = vpack.c.b16 %v2000, %v1999
    %v2014 = vpack.c.b16 %v2002, %v2001
    %v2015 = vpack.c.b16 %v2004, %v2003
    %v2016 = vpack.c.b16 %v2006, %v2005
    %v2017 = vpack.c.b16 %v2008, %v2007
    %v2018 = vpack.c.b16 %v2010, %v2009
    %2027 = vmatprep.subr.bf16.mxu0 0
    %2028 = vmatpush1.bf16.msra.mxu0 %v2011
    %2029 = vmatprep.subr.bf16.mxu0 0
    %2030 = vmatpush1.bf16.msra.mxu0 %v2012
    %2031 = vmatprep.subr.bf16.mxu0 0
    %2032 = vmatpush1.bf16.msra.mxu0 %v2013
    %2033 = vmatprep.subr.bf16.mxu0 0
    %2034 = vmatpush1.bf16.msra.mxu0 %v2014
    %2035 = vmatprep.subr.bf16.mxu0 0
    %2036 = vmatpush1.bf16.msra.mxu0 %v2015
    %2037 = vmatprep.subr.bf16.mxu0 0
    %2038 = vmatpush1.bf16.msra.mxu0 %v2016
    %2039 = vmatprep.subr.bf16.mxu0 0
    %2040 = vmatpush1.bf16.msra.mxu0 %v2017
    %2041 = vmatprep.subr.bf16.mxu0 0
    %2042 = vmatpush1.bf16.msra.mxu0 %v2018
    %2043 = vmatprep.subr.bf16.mxu0 0
    %2044 = vmatpush1.bf16.msra.mxu0 0
    %2045 = vmatprep.subr.bf16.mxu0 0
    %2046 = vmatpush1.bf16.msra.mxu0 0
    %2047 = vmatprep.subr.bf16.mxu0 0
    %2048 = vmatpush1.bf16.msra.mxu0 0
    %2049 = vmatprep.subr.bf16.mxu0 0
    %2050 = vmatpush1.bf16.msra.mxu0 0
    %2051 = vmatprep.subr.bf16.mxu0 0
    %2052 = vmatpush1.bf16.msra.mxu0 0
    %2053 = vmatprep.subr.bf16.mxu0 0
    %2054 = vmatpush1.bf16.msra.mxu0 0
    %2055 = vmatprep.subr.bf16.mxu0 0
    %2056 = vmatpush1.bf16.msra.mxu0 0
    %2057 = vmatprep.subr.bf16.mxu0 0
    %2058 = vmatpush1.bf16.msra.mxu0 0
    %2059 = vmatprep.mubr.bf16.mxu0 0
    %2060 = vmatmul.mubr.bf16.gmra.mrb[0].mxu0 %v1913
    %v2061 = vpop.f32.mrb[0].mxu0
    %v2062 = vadd.f32 %v1978, %v2061
    %v2063 = vpop.f32.mrb[0].mxu0
    %v2064 = vpop.f32.mrb[0].mxu0
    %v2065 = vadd.f32 %v1978, %v2064
    %v2066 = vpop.f32.mrb[0].mxu0
    %2067 = vdwg.mxu0
    %v2068 = vmax.f32 %v2062, 0.0
    %v2069 = vmax.f32 %v2065, 0.0
    %v2070 = vpack.c.bf16 %v2069, %v2068
    %2071 = vmatprep.subr.bf16.mxu0 0
    %2072 = vmatpush1.bf16.msra.mxu0 %v2011
    %2073 = vmatprep.subr.bf16.mxu0 0
    %2074 = vmatpush1.bf16.msra.mxu0 %v2012
    %2075 = vmatprep.subr.bf16.mxu0 0
    %2076 = vmatpush1.bf16.msra.mxu0 %v2013
    %2077 = vmatprep.subr.bf16.mxu0 0
    %2078 = vmatpush1.bf16.msra.mxu0 %v2014
    %2079 = vmatprep.subr.bf16.mxu0 0
    %2080 = vmatpush1.bf16.msra.mxu0 %v2015
    %2081 = vmatprep.subr.bf16.mxu0 0
    %2082 = vmatpush1.bf16.msra.mxu0 %v2016
    %2083 = vmatprep.subr.bf16.mxu0 0
    %2084 = vmatpush1.bf16.msra.mxu0 %v2017
    %2085 = vmatprep.subr.bf16.mxu0 0
    %2086 = vmatpush1.bf16.msra.mxu0 %v2018
    %2087 = vmatprep.subr.bf16.mxu0 0
    %2088 = vmatpush1.bf16.msra.mxu0 0
    %2089 = vmatprep.subr.bf16.mxu0 0
    %2090 = vmatpush1.bf16.msra.mxu0 0
    %2091 = vmatprep.subr.bf16.mxu0 0
    %2092 = vmatpush1.bf16.msra.mxu0 0
    %2093 = vmatprep.subr.bf16.mxu0 0
    %2094 = vmatpush1.bf16.msra.mxu0 0
    %2095 = vmatprep.subr.bf16.mxu0 0
    %2096 = vmatpush1.bf16.msra.mxu0 0
    %2097 = vmatprep.subr.bf16.mxu0 0
    %2098 = vmatpush1.bf16.msra.mxu0 0
    %2099 = vmatprep.subr.bf16.mxu0 0
    %2100 = vmatpush1.bf16.msra.mxu0 0
    %2101 = vmatprep.subr.bf16.mxu0 0
    %2102 = vmatpush1.bf16.msra.mxu0 0
    %2103 = vmatprep.mubr.bf16.mxu0 0
    %2104 = vmatmul.mubr.bf16.gmra.mrb[0].mxu0 %v1957
    %v2105 = vpop.f32.mrb[0].mxu0
    %v2106 = vadd.f32 %v1978, %v2105
    %v2107 = vpop.f32.mrb[0].mxu0
    %v2108 = vpop.f32.mrb[0].mxu0
    %v2109 = vadd.f32 %v1978, %v2108
    %v2110 = vpop.f32.mrb[0].mxu0
    %2111 = vdwg.mxu0
    %v2112 = vmax.f32 %v2106, 0.0
    %v2113 = vmax.f32 %v2109, 0.0
    %v2114 = vpack.c.bf16 %v2113, %v2112
    %s2115 = scalar_lea.vmem [#allocation5], 832
    %v2116 = vld [vmem:[%s2115] sm:$0xf]
    %v2117 = vld [vmem:[%s2115 + $0x4] sm:$0xf]
    %v2118 = vld [vmem:[%s2115 + $0x8] sm:$0xf]
    %v2119 = vld [vmem:[%s2115 + $0xc] sm:$0xf]
    %v2120 = vld [vmem:[%s2115 + $0x10] sm:$0xf]
    %v2121 = vld [vmem:[%s2115 + $0x14] sm:$0xf]
    %v2122 = vld [vmem:[%s2115 + $0x18] sm:$0xf]
    %v2123 = vld [vmem:[%s2115 + $0x1c] sm:$0xf]
    %v2124 = vld [vmem:[%s2115 + $0x20] sm:$0xf]
    %v2125 = vld [vmem:[%s2115 + $0x24] sm:$0xf]
    %v2126 = vld [vmem:[%s2115 + $0x28] sm:$0xf]
    %v2127 = vld [vmem:[%s2115 + $0x2c] sm:$0xf]
    %v2128 = vld [vmem:[%s2115 + $0x30] sm:$0xf]
    %v2129 = vld [vmem:[%s2115 + $0x34] sm:$0xf]
    %v2130 = vld [vmem:[%s2115 + $0x38] sm:$0xf]
    %v2131 = vld [vmem:[%s2115 + $0x3c] sm:$0xf]
    %v2132 = vlaneseq
    %v2133 = vshrl.u32 %v2132, 7
    %v2134 = vsub.s32 5, %v2133
    %v2135 = vrot.slane %v62, %v2134
    %v2152 = vunpack.c.l.b16 %v2116
    %v2153 = vunpack.c.l.b16 %v2117
    %v2154 = vunpack.c.l.b16 %v2118
    %v2155 = vunpack.c.l.b16 %v2119
    %v2156 = vunpack.c.l.b16 %v2120
    %v2157 = vunpack.c.l.b16 %v2121
    %v2158 = vunpack.c.l.b16 %v2122
    %v2159 = vunpack.c.l.b16 %v2123
    %v2160 = vunpack.c.l.b16 %v2124
    %v2161 = vunpack.c.l.b16 %v2125
    %v2162 = vunpack.c.l.b16 %v2126
    %v2163 = vunpack.c.l.b16 %v2127
    %v2164 = vunpack.c.l.b16 %v2128
    %v2165 = vunpack.c.l.b16 %v2129
    %v2166 = vunpack.c.l.b16 %v2130
    %v2167 = vunpack.c.l.b16 %v2131
    %v2168 = vpack.c.b16 %v2153, %v2152
    %v2169 = vpack.c.b16 %v2155, %v2154
    %v2170 = vpack.c.b16 %v2157, %v2156
    %v2171 = vpack.c.b16 %v2159, %v2158
    %v2172 = vpack.c.b16 %v2161, %v2160
    %v2173 = vpack.c.b16 %v2163, %v2162
    %v2174 = vpack.c.b16 %v2165, %v2164
    %v2175 = vpack.c.b16 %v2167, %v2166
    %2184 = vmatprep.subr.bf16.mxu0 0
    %2185 = vmatpush1.bf16.msra.mxu0 %v2168
    %2186 = vmatprep.subr.bf16.mxu0 0
    %2187 = vmatpush1.bf16.msra.mxu0 %v2169
    %2188 = vmatprep.subr.bf16.mxu0 0
    %2189 = vmatpush1.bf16.msra.mxu0 %v2170
    %2190 = vmatprep.subr.bf16.mxu0 0
    %2191 = vmatpush1.bf16.msra.mxu0 %v2171
    %2192 = vmatprep.subr.bf16.mxu0 0
    %2193 = vmatpush1.bf16.msra.mxu0 %v2172
    %2194 = vmatprep.subr.bf16.mxu0 0
    %2195 = vmatpush1.bf16.msra.mxu0 %v2173
    %2196 = vmatprep.subr.bf16.mxu0 0
    %2197 = vmatpush1.bf16.msra.mxu0 %v2174
    %2198 = vmatprep.subr.bf16.mxu0 0
    %2199 = vmatpush1.bf16.msra.mxu0 %v2175
    %2200 = vmatprep.subr.bf16.mxu0 0
    %2201 = vmatpush1.bf16.msra.mxu0 0
    %2202 = vmatprep.subr.bf16.mxu0 0
    %2203 = vmatpush1.bf16.msra.mxu0 0
    %2204 = vmatprep.subr.bf16.mxu0 0
    %2205 = vmatpush1.bf16.msra.mxu0 0
    %2206 = vmatprep.subr.bf16.mxu0 0
    %2207 = vmatpush1.bf16.msra.mxu0 0
    %2208 = vmatprep.subr.bf16.mxu0 0
    %2209 = vmatpush1.bf16.msra.mxu0 0
    %2210 = vmatprep.subr.bf16.mxu0 0
    %2211 = vmatpush1.bf16.msra.mxu0 0
    %2212 = vmatprep.subr.bf16.mxu0 0
    %2213 = vmatpush1.bf16.msra.mxu0 0
    %2214 = vmatprep.subr.bf16.mxu0 0
    %2215 = vmatpush1.bf16.msra.mxu0 0
    %2216 = vmatprep.mubr.bf16.mxu0 0
    %2217 = vmatmul.mubr.bf16.gmra.mrb[0].mxu0 %v2070
    %v2218 = vpop.f32.mrb[0].mxu0
    %v2219 = vadd.f32 %v2135, %v2218
    %v2220 = vpop.f32.mrb[0].mxu0
    %v2221 = vpop.f32.mrb[0].mxu0
    %v2222 = vadd.f32 %v2135, %v2221
    %v2223 = vpop.f32.mrb[0].mxu0
    %2224 = vdwg.mxu0
    %v2225 = vmax.f32 %v2219, 0.0
    %v2226 = vmax.f32 %v2222, 0.0
    %v2227 = vpack.c.bf16 %v2226, %v2225
    %2228 = vmatprep.subr.bf16.mxu0 0
    %2229 = vmatpush1.bf16.msra.mxu0 %v2168
    %2230 = vmatprep.subr.bf16.mxu0 0
    %2231 = vmatpush1.bf16.msra.mxu0 %v2169
    %2232 = vmatprep.subr.bf16.mxu0 0
    %2233 = vmatpush1.bf16.msra.mxu0 %v2170
    %2234 = vmatprep.subr.bf16.mxu0 0
    %2235 = vmatpush1.bf16.msra.mxu0 %v2171
    %2236 = vmatprep.subr.bf16.mxu0 0
    %2237 = vmatpush1.bf16.msra.mxu0 %v2172
    %2238 = vmatprep.subr.bf16.mxu0 0
    %2239 = vmatpush1.bf16.msra.mxu0 %v2173
    %2240 = vmatprep.subr.bf16.mxu0 0
    %2241 = vmatpush1.bf16.msra.mxu0 %v2174
    %2242 = vmatprep.subr.bf16.mxu0 0
    %2243 = vmatpush1.bf16.msra.mxu0 %v2175
    %2244 = vmatprep.subr.bf16.mxu0 0
    %2245 = vmatpush1.bf16.msra.mxu0 0
    %2246 = vmatprep.subr.bf16.mxu0 0
    %2247 = vmatpush1.bf16.msra.mxu0 0
    %2248 = vmatprep.subr.bf16.mxu0 0
    %2249 = vmatpush1.bf16.msra.mxu0 0
    %2250 = vmatprep.subr.bf16.mxu0 0
    %2251 = vmatpush1.bf16.msra.mxu0 0
    %2252 = vmatprep.subr.bf16.mxu0 0
    %2253 = vmatpush1.bf16.msra.mxu0 0
    %2254 = vmatprep.subr.bf16.mxu0 0
    %2255 = vmatpush1.bf16.msra.mxu0 0
    %2256 = vmatprep.subr.bf16.mxu0 0
    %2257 = vmatpush1.bf16.msra.mxu0 0
    %2258 = vmatprep.subr.bf16.mxu0 0
    %2259 = vmatpush1.bf16.msra.mxu0 0
    %2260 = vmatprep.mubr.bf16.mxu0 0
    %2261 = vmatmul.mubr.bf16.gmra.mrb[0].mxu0 %v2114
    %v2262 = vpop.f32.mrb[0].mxu0
    %v2263 = vadd.f32 %v2135, %v2262
    %v2264 = vpop.f32.mrb[0].mxu0
    %v2265 = vpop.f32.mrb[0].mxu0
    %v2266 = vadd.f32 %v2135, %v2265
    %v2267 = vpop.f32.mrb[0].mxu0
    %2268 = vdwg.mxu0
    %v2269 = vmax.f32 %v2263, 0.0
    %v2270 = vmax.f32 %v2266, 0.0
    %v2271 = vpack.c.bf16 %v2270, %v2269
    %s2272 = scalar_lea.vmem [#allocation5], 896
    %v2273 = vld [vmem:[%s2272] sm:$0xf]
    %v2274 = vld [vmem:[%s2272 + $0x4] sm:$0xf]
    %v2275 = vld [vmem:[%s2272 + $0x8] sm:$0xf]
    %v2276 = vld [vmem:[%s2272 + $0xc] sm:$0xf]
    %v2277 = vld [vmem:[%s2272 + $0x10] sm:$0xf]
    %v2278 = vld [vmem:[%s2272 + $0x14] sm:$0xf]
    %v2279 = vld [vmem:[%s2272 + $0x18] sm:$0xf]
    %v2280 = vld [vmem:[%s2272 + $0x1c] sm:$0xf]
    %v2281 = vld [vmem:[%s2272 + $0x20] sm:$0xf]
    %v2282 = vld [vmem:[%s2272 + $0x24] sm:$0xf]
    %v2283 = vld [vmem:[%s2272 + $0x28] sm:$0xf]
    %v2284 = vld [vmem:[%s2272 + $0x2c] sm:$0xf]
    %v2285 = vld [vmem:[%s2272 + $0x30] sm:$0xf]
    %v2286 = vld [vmem:[%s2272 + $0x34] sm:$0xf]
    %v2287 = vld [vmem:[%s2272 + $0x38] sm:$0xf]
    %v2288 = vld [vmem:[%s2272 + $0x3c] sm:$0xf]
    %v2289 = vlaneseq
    %v2290 = vshrl.u32 %v2289, 7
    %v2291 = vsub.s32 6, %v2290
    %v2292 = vrot.slane %v62, %v2291
    %v2309 = vunpack.c.l.b16 %v2273
    %v2310 = vunpack.c.l.b16 %v2274
    %v2311 = vunpack.c.l.b16 %v2275
    %v2312 = vunpack.c.l.b16 %v2276
    %v2313 = vunpack.c.l.b16 %v2277
    %v2314 = vunpack.c.l.b16 %v2278
    %v2315 = vunpack.c.l.b16 %v2279
    %v2316 = vunpack.c.l.b16 %v2280
    %v2317 = vunpack.c.l.b16 %v2281
    %v2318 = vunpack.c.l.b16 %v2282
    %v2319 = vunpack.c.l.b16 %v2283
    %v2320 = vunpack.c.l.b16 %v2284
    %v2321 = vunpack.c.l.b16 %v2285
    %v2322 = vunpack.c.l.b16 %v2286
    %v2323 = vunpack.c.l.b16 %v2287
    %v2324 = vunpack.c.l.b16 %v2288
    %v2325 = vpack.c.b16 %v2310, %v2309
    %v2326 = vpack.c.b16 %v2312, %v2311
    %v2327 = vpack.c.b16 %v2314, %v2313
    %v2328 = vpack.c.b16 %v2316, %v2315
    %v2329 = vpack.c.b16 %v2318, %v2317
    %v2330 = vpack.c.b16 %v2320, %v2319
    %v2331 = vpack.c.b16 %v2322, %v2321
    %v2332 = vpack.c.b16 %v2324, %v2323
    %2341 = vmatprep.subr.bf16.mxu0 0
    %2342 = vmatpush1.bf16.msra.mxu0 %v2325
    %2343 = vmatprep.subr.bf16.mxu0 0
    %2344 = vmatpush1.bf16.msra.mxu0 %v2326
    %2345 = vmatprep.subr.bf16.mxu0 0
    %2346 = vmatpush1.bf16.msra.mxu0 %v2327
    %2347 = vmatprep.subr.bf16.mxu0 0
    %2348 = vmatpush1.bf16.msra.mxu0 %v2328
    %2349 = vmatprep.subr.bf16.mxu0 0
    %2350 = vmatpush1.bf16.msra.mxu0 %v2329
    %2351 = vmatprep.subr.bf16.mxu0 0
    %2352 = vmatpush1.bf16.msra.mxu0 %v2330
    %2353 = vmatprep.subr.bf16.mxu0 0
    %2354 = vmatpush1.bf16.msra.mxu0 %v2331
    %2355 = vmatprep.subr.bf16.mxu0 0
    %2356 = vmatpush1.bf16.msra.mxu0 %v2332
    %2357 = vmatprep.subr.bf16.mxu0 0
    %2358 = vmatpush1.bf16.msra.mxu0 0
    %2359 = vmatprep.subr.bf16.mxu0 0
    %2360 = vmatpush1.bf16.msra.mxu0 0
    %2361 = vmatprep.subr.bf16.mxu0 0
    %2362 = vmatpush1.bf16.msra.mxu0 0
    %2363 = vmatprep.subr.bf16.mxu0 0
    %2364 = vmatpush1.bf16.msra.mxu0 0
    %2365 = vmatprep.subr.bf16.mxu0 0
    %2366 = vmatpush1.bf16.msra.mxu0 0
    %2367 = vmatprep.subr.bf16.mxu0 0
    %2368 = vmatpush1.bf16.msra.mxu0 0
    %2369 = vmatprep.subr.bf16.mxu0 0
    %2370 = vmatpush1.bf16.msra.mxu0 0
    %2371 = vmatprep.subr.bf16.mxu0 0
    %2372 = vmatpush1.bf16.msra.mxu0 0
    %2373 = vmatprep.mubr.bf16.mxu0 0
    %2374 = vmatmul.mubr.bf16.gmra.mrb[0].mxu0 %v2227
    %v2375 = vpop.f32.mrb[0].mxu0
    %v2376 = vadd.f32 %v2292, %v2375
    %v2377 = vpop.f32.mrb[0].mxu0
    %v2378 = vpop.f32.mrb[0].mxu0
    %v2379 = vadd.f32 %v2292, %v2378
    %v2380 = vpop.f32.mrb[0].mxu0
    %2381 = vdwg.mxu0
    %v2382 = vmax.f32 %v2376, 0.0
    %v2383 = vmax.f32 %v2379, 0.0
    %v2384 = vpack.c.bf16 %v2383, %v2382
    %2385 = vmatprep.subr.bf16.mxu0 0
    %2386 = vmatpush1.bf16.msra.mxu0 %v2325
    %2387 = vmatprep.subr.bf16.mxu0 0
    %2388 = vmatpush1.bf16.msra.mxu0 %v2326
    %2389 = vmatprep.subr.bf16.mxu0 0
    %2390 = vmatpush1.bf16.msra.mxu0 %v2327
    %2391 = vmatprep.subr.bf16.mxu0 0
    %2392 = vmatpush1.bf16.msra.mxu0 %v2328
    %2393 = vmatprep.subr.bf16.mxu0 0
    %2394 = vmatpush1.bf16.msra.mxu0 %v2329
    %2395 = vmatprep.subr.bf16.mxu0 0
    %2396 = vmatpush1.bf16.msra.mxu0 %v2330
    %2397 = vmatprep.subr.bf16.mxu0 0
    %2398 = vmatpush1.bf16.msra.mxu0 %v2331
    %2399 = vmatprep.subr.bf16.mxu0 0
    %2400 = vmatpush1.bf16.msra.mxu0 %v2332
    %2401 = vmatprep.subr.bf16.mxu0 0
    %2402 = vmatpush1.bf16.msra.mxu0 0
    %2403 = vmatprep.subr.bf16.mxu0 0
    %2404 = vmatpush1.bf16.msra.mxu0 0
    %2405 = vmatprep.subr.bf16.mxu0 0
    %2406 = vmatpush1.bf16.msra.mxu0 0
    %2407 = vmatprep.subr.bf16.mxu0 0
    %2408 = vmatpush1.bf16.msra.mxu0 0
    %2409 = vmatprep.subr.bf16.mxu0 0
    %2410 = vmatpush1.bf16.msra.mxu0 0
    %2411 = vmatprep.subr.bf16.mxu0 0
    %2412 = vmatpush1.bf16.msra.mxu0 0
    %2413 = vmatprep.subr.bf16.mxu0 0
    %2414 = vmatpush1.bf16.msra.mxu0 0
    %2415 = vmatprep.subr.bf16.mxu0 0
    %2416 = vmatpush1.bf16.msra.mxu0 0
    %2417 = vmatprep.mubr.bf16.mxu0 0
    %2418 = vmatmul.mubr.bf16.gmra.mrb[0].mxu0 %v2271
    %v2419 = vpop.f32.mrb[0].mxu0
    %v2420 = vadd.f32 %v2292, %v2419
    %v2421 = vpop.f32.mrb[0].mxu0
    %v2422 = vpop.f32.mrb[0].mxu0
    %v2423 = vadd.f32 %v2292, %v2422
    %v2424 = vpop.f32.mrb[0].mxu0
    %2425 = vdwg.mxu0
    %v2426 = vmax.f32 %v2420, 0.0
    %v2427 = vmax.f32 %v2423, 0.0
    %v2428 = vpack.c.bf16 %v2427, %v2426
    %s2429 = scalar_lea.vmem [#allocation5], 960
    %v2430 = vld [vmem:[%s2429] sm:$0xf]
    %v2431 = vld [vmem:[%s2429 + $0x4] sm:$0xf]
    %v2432 = vld [vmem:[%s2429 + $0x8] sm:$0xf]
    %v2433 = vld [vmem:[%s2429 + $0xc] sm:$0xf]
    %v2434 = vld [vmem:[%s2429 + $0x10] sm:$0xf]
    %v2435 = vld [vmem:[%s2429 + $0x14] sm:$0xf]
    %v2436 = vld [vmem:[%s2429 + $0x18] sm:$0xf]
    %v2437 = vld [vmem:[%s2429 + $0x1c] sm:$0xf]
    %v2438 = vld [vmem:[%s2429 + $0x20] sm:$0xf]
    %v2439 = vld [vmem:[%s2429 + $0x24] sm:$0xf]
    %v2440 = vld [vmem:[%s2429 + $0x28] sm:$0xf]
    %v2441 = vld [vmem:[%s2429 + $0x2c] sm:$0xf]
    %v2442 = vld [vmem:[%s2429 + $0x30] sm:$0xf]
    %v2443 = vld [vmem:[%s2429 + $0x34] sm:$0xf]
    %v2444 = vld [vmem:[%s2429 + $0x38] sm:$0xf]
    %v2445 = vld [vmem:[%s2429 + $0x3c] sm:$0xf]
    %v2446 = vlaneseq
    %v2447 = vshrl.u32 %v2446, 7
    %v2448 = vsub.s32 7, %v2447
    %v2449 = vrot.slane %v62, %v2448
    %v2466 = vunpack.c.l.b16 %v2430
    %v2467 = vunpack.c.l.b16 %v2431
    %v2468 = vunpack.c.l.b16 %v2432
    %v2469 = vunpack.c.l.b16 %v2433
    %v2470 = vunpack.c.l.b16 %v2434
    %v2471 = vunpack.c.l.b16 %v2435
    %v2472 = vunpack.c.l.b16 %v2436
    %v2473 = vunpack.c.l.b16 %v2437
    %v2474 = vunpack.c.l.b16 %v2438
    %v2475 = vunpack.c.l.b16 %v2439
    %v2476 = vunpack.c.l.b16 %v2440
    %v2477 = vunpack.c.l.b16 %v2441
    %v2478 = vunpack.c.l.b16 %v2442
    %v2479 = vunpack.c.l.b16 %v2443
    %v2480 = vunpack.c.l.b16 %v2444
    %v2481 = vunpack.c.l.b16 %v2445
    %v2482 = vpack.c.b16 %v2467, %v2466
    %v2483 = vpack.c.b16 %v2469, %v2468
    %v2484 = vpack.c.b16 %v2471, %v2470
    %v2485 = vpack.c.b16 %v2473, %v2472
    %v2486 = vpack.c.b16 %v2475, %v2474
    %v2487 = vpack.c.b16 %v2477, %v2476
    %v2488 = vpack.c.b16 %v2479, %v2478
    %v2489 = vpack.c.b16 %v2481, %v2480
    %2498 = vmatprep.subr.bf16.mxu0 0
    %2499 = vmatpush1.bf16.msra.mxu0 %v2482
    %2500 = vmatprep.subr.bf16.mxu0 0
    %2501 = vmatpush1.bf16.msra.mxu0 %v2483
    %2502 = vmatprep.subr.bf16.mxu0 0
    %2503 = vmatpush1.bf16.msra.mxu0 %v2484
    %2504 = vmatprep.subr.bf16.mxu0 0
    %2505 = vmatpush1.bf16.msra.mxu0 %v2485
    %2506 = vmatprep.subr.bf16.mxu0 0
    %2507 = vmatpush1.bf16.msra.mxu0 %v2486
    %2508 = vmatprep.subr.bf16.mxu0 0
    %2509 = vmatpush1.bf16.msra.mxu0 %v2487
    %2510 = vmatprep.subr.bf16.mxu0 0
    %2511 = vmatpush1.bf16.msra.mxu0 %v2488
    %2512 = vmatprep.subr.bf16.mxu0 0
    %2513 = vmatpush1.bf16.msra.mxu0 %v2489
    %2514 = vmatprep.subr.bf16.mxu0 0
    %2515 = vmatpush1.bf16.msra.mxu0 0
    %2516 = vmatprep.subr.bf16.mxu0 0
    %2517 = vmatpush1.bf16.msra.mxu0 0
    %2518 = vmatprep.subr.bf16.mxu0 0
    %2519 = vmatpush1.bf16.msra.mxu0 0
    %2520 = vmatprep.subr.bf16.mxu0 0
    %2521 = vmatpush1.bf16.msra.mxu0 0
    %2522 = vmatprep.subr.bf16.mxu0 0
    %2523 = vmatpush1.bf16.msra.mxu0 0
    %2524 = vmatprep.subr.bf16.mxu0 0
    %2525 = vmatpush1.bf16.msra.mxu0 0
    %2526 = vmatprep.subr.bf16.mxu0 0
    %2527 = vmatpush1.bf16.msra.mxu0 0
    %2528 = vmatprep.subr.bf16.mxu0 0
    %2529 = vmatpush1.bf16.msra.mxu0 0
    %2530 = vmatprep.mubr.bf16.mxu0 0
    %2531 = vmatmul.mubr.bf16.gmra.mrb[0].mxu0 %v2384
    %v2532 = vpop.f32.mrb[0].mxu0
    %v2533 = vadd.f32 %v2449, %v2532
    %v2534 = vpop.f32.mrb[0].mxu0
    %v2535 = vpop.f32.mrb[0].mxu0
    %v2536 = vadd.f32 %v2449, %v2535
    %v2537 = vpop.f32.mrb[0].mxu0
    %2538 = vdwg.mxu0
    %2539 = vmatprep.subr.bf16.mxu0 0
    %2540 = vmatpush1.bf16.msra.mxu0 %v2482
    %2541 = vmatprep.subr.bf16.mxu0 0
    %2542 = vmatpush1.bf16.msra.mxu0 %v2483
    %2543 = vmatprep.subr.bf16.mxu0 0
    %2544 = vmatpush1.bf16.msra.mxu0 %v2484
    %2545 = vmatprep.subr.bf16.mxu0 0
    %2546 = vmatpush1.bf16.msra.mxu0 %v2485
    %2547 = vmatprep.subr.bf16.mxu0 0
    %2548 = vmatpush1.bf16.msra.mxu0 %v2486
    %2549 = vmatprep.subr.bf16.mxu0 0
    %2550 = vmatpush1.bf16.msra.mxu0 %v2487
    %2551 = vmatprep.subr.bf16.mxu0 0
    %2552 = vmatpush1.bf16.msra.mxu0 %v2488
    %2553 = vmatprep.subr.bf16.mxu0 0
    %2554 = vmatpush1.bf16.msra.mxu0 %v2489
    %2555 = vmatprep.subr.bf16.mxu0 0
    %2556 = vmatpush1.bf16.msra.mxu0 0
    %2557 = vmatprep.subr.bf16.mxu0 0
    %2558 = vmatpush1.bf16.msra.mxu0 0
    %2559 = vmatprep.subr.bf16.mxu0 0
    %2560 = vmatpush1.bf16.msra.mxu0 0
    %2561 = vmatprep.subr.bf16.mxu0 0
    %2562 = vmatpush1.bf16.msra.mxu0 0
    %2563 = vmatprep.subr.bf16.mxu0 0
    %2564 = vmatpush1.bf16.msra.mxu0 0
    %2565 = vmatprep.subr.bf16.mxu0 0
    %2566 = vmatpush1.bf16.msra.mxu0 0
    %2567 = vmatprep.subr.bf16.mxu0 0
    %2568 = vmatpush1.bf16.msra.mxu0 0
    %2569 = vmatprep.subr.bf16.mxu0 0
    %2570 = vmatpush1.bf16.msra.mxu0 0
    %2571 = vmatprep.mubr.bf16.mxu0 0
    %2572 = vmatmul.mubr.bf16.gmra.mrb[0].mxu0 %v2428
    %v2573 = vpop.f32.mrb[0].mxu0
    %v2574 = vadd.f32 %v2449, %v2573
    %v2575 = vpop.f32.mrb[0].mxu0
    %v2576 = vpop.f32.mrb[0].mxu0
    %v2577 = vadd.f32 %v2449, %v2576
    %v2578 = vpop.f32.mrb[0].mxu0
    %2579 = vdwg.mxu0
    %2580 = vst [vmem:[#allocation8] sm:$0xff] %v2533
    %2581 = vst [vmem:[#allocation8 + $0x8] sm:$0xff] %v2536
    %2582 = vst [vmem:[#allocation8 + $0x10] sm:$0xff] %v2574
    %2583 = vst [vmem:[#allocation8 + $0x18] sm:$0xff] %v2577
    // Predicated region
    $region26: #{tpu_custom_call.1} parent=1 // pred_check
      _
    $region27: #{tpu_custom_call.1} parent=1 // pred_check_branch
      %2585 = sbr.rel (0) target = $region29
    $region28: #{tpu_custom_call.1} parent=1 // pred_region
      %s2587 = ssub.s32 512, 512
      %2588 = vsyncadd [#allocation4], %s2587
      %s2589 = sshll.u32 [#allocation8], 4
      %s2590 = int_to_ptr.vmem [resolvable:$true] %s2589
      %2595 = dma.vmem_to_hbm [thread:$0]  %s2590, 512, %s3, [#allocation4], 128, 128, 8
    $region29: #{tpu_custom_call.1} parent=1 // pred_fallthru
      _
    // Predicated region
    $region30: #{tpu_custom_call.1} parent=1 // pred_check
      _
    $region31: #{tpu_custom_call.1} parent=1 // pred_check_branch
      %2597 = sbr.rel (0) target = $region33
    $region32: #{tpu_custom_call.1} parent=1 // pred_region
      %2598 = dma.done [#allocation4], 512
    $region33: #{tpu_custom_call.1} parent=1 // pred_fallthru
      _
    %2599 = vsyncpa [#allocation3], 1
    %2600 = vsyncpa [#allocation6], 1
    %2601 = vsyncpa [#allocation4], 1

</llo_original>
